<compile_context>
chip_gen: v7x
topology: tpu7x:2x2x1
jax: 0.10.0
libtpu: 0.0.40
codegen_flags: <defaults>
</compile_context>

<pallas_src>
import functools

import jax
import jax.numpy as jnp
import numpy as np
from jax import lax
from jax.experimental import pallas as pl
from jax.experimental.pallas import tpu as pltpu

_SQRT_HALF = 0.7071067811865476
# Abramowitz & Stegun 7.1.26 erf constants (|err| < 1.5e-7).
_A1, _A2, _A3, _A4, _A5 = 0.254829592, -0.284496736, 1.421413741, -1.453152027, 1.061405429
_P = 0.3275911


def _gelu_erf_in_kernel(x):
    """Exact (erf-form) GELU; the rational-poly divide runs on the EUP."""
    xs = x * _SQRT_HALF
    ax = jnp.abs(xs)
    t = pl.reciprocal(1.0 + _P * ax, approx=True)           # EUP slot, ~free
    poly = ((((_A5 * t + _A4) * t + _A3) * t + _A2) * t + _A1) * t
    erf_ax = 1.0 - poly * jnp.exp(-ax * ax)                  # exp -> EUP
    erf_xs = jnp.where(xs >= 0.0, erf_ax, -erf_ax)
    return 0.5 * x * (1.0 + erf_xs)


def _pack_lane_dense(y, rows, lanes):
    """Row-major flatten of (m, c) -> (rows, lanes) via lane-axis concat so the
    final store is a full-width (unmasked) vst.  Requires c | lanes."""
    m, c = y.shape
    per = lanes // c
    out_rows = []
    for r in range(rows):
        chunk = [y[r * per + j: r * per + j + 1, :] for j in range(per)]
        out_rows.append(jnp.concatenate(chunk, axis=1))
    return out_rows[0] if rows == 1 else jnp.concatenate(out_rows, axis=0)


def _fused_kernel(x_ref, *refs, cfgs, bb, l0):
    """All conv blocks for `bb` batch samples; activation kept as (bb*L, C)."""
    out_ref = refs[-1]
    prefs = refs[:-1]

    y = x_ref[...]                                           # (bb*L0, Cin) f32
    l_cur = l0
    pi = 0
    for (t_pool, use_gn) in cfgs:
        w = prefs[pi]; pi += 1                               # Ref (3, Cin, Cout) bf16
        cout = w.shape[2]
        m = bb * l_cur

        # ---- Conv1d(k=3, stride=1, pad=1, no bias), shift-the-outputs form --
        # out[l] = x[l-1] @ W0 + x[l] @ W1 + x[l+1] @ W2.  Three bf16 MXU dots
        # share one LHS; the +-1 taps are sublane rolls (XLU) of the outputs.
        # Roll wrap-around lands exactly on the per-sample boundary rows, which
        # the masks zero out (the "same" zero padding).
        yb = y.astype(jnp.bfloat16)
        z0 = jnp.dot(yb, w[0], preferred_element_type=jnp.float32)
        z1 = jnp.dot(yb, w[1], preferred_element_type=jnp.float32)
        z2 = jnp.dot(yb, w[2], preferred_element_type=jnp.float32)

        row = lax.broadcasted_iota(jnp.int32, (m, 1), 0)
        is_first = (row % l_cur) == 0                        # l == 0   within sample
        is_last = (row % l_cur) == (l_cur - 1)               # l == L-1 within sample
        down = pltpu.roll(z0, shift=1, axis=0)               # -> z0[l-1]
        up = pltpu.roll(z2, shift=m - 1, axis=0)             # -> z2[l+1] (== shift -1)
        acc = z1 + jnp.where(is_first, 0.0, down) + jnp.where(is_last, 0.0, up)

        # ---- Fp32GroupNorm(C, C, affine): per (sample, channel) over L ------
        if use_gn:
            gamma = prefs[pi][...]; pi += 1                  # (1, Cout) f32
            beta = prefs[pi][...]; pi += 1                   # (1, Cout) f32
            if bb == 1:
                mean = jnp.mean(acc, axis=0, keepdims=True)
                cen = acc - mean
                var = jnp.mean(cen * cen, axis=0, keepdims=True)   # two-pass var
                acc = cen * lax.rsqrt(var + 1e-5)
            else:
                a3 = acc.reshape(bb, l_cur, cout)
                mean = jnp.mean(a3, axis=1, keepdims=True)
                cen = a3 - mean
                var = jnp.mean(cen * cen, axis=1, keepdims=True)   # two-pass var
                acc = (cen * lax.rsqrt(var + 1e-5)).reshape(m, cout)
            acc = acc * gamma + beta

        # ---- MaxPool1d(t): roll + running max, then one subsample -----------
        if t_pool > 1:
            lo = l_cur // t_pool
            if l_cur % t_pool != 0:                          # floor mode: crop per sample
                acc = acc.reshape(bb, l_cur, cout)[:, :lo * t_pool, :]
                acc = acc.reshape(bb * lo * t_pool, cout)
            mrows = bb * lo * t_pool
            pooled = acc
            for i in range(1, t_pool):
                pooled = jnp.maximum(pooled,
                                     pltpu.roll(acc, shift=mrows - i, axis=0))
            acc = pooled.reshape(bb * lo, t_pool, cout)[:, 0, :]
            l_cur = lo

        # ---- GELU (exact / erf form) -----------------------------------------
        y = _gelu_erf_in_kernel(acc)                         # (bb*l_cur, Cout) f32

    # Lane-dense store: pack to the out block's 128-wide minor dim when the
    # wrapper requested it (out_ref shape differs from y's natural shape).
    if out_ref.shape == y.shape:
        out_ref[...] = y.astype(out_ref.dtype)
    else:
        rows, lanes = out_ref.shape
        out_ref[...] = _pack_lane_dense(y, rows, lanes).astype(out_ref.dtype)


def _pick_batch_block(batch, max_bb=8):
    """Largest divisor of `batch` (<= max_bb) that still leaves >= 2 grid steps
    (keeps the parallel grid axis split across both TensorCores on v7x while
    amortizing per-grid-step overhead / feeding the MXU with a bigger M)."""
    best = 1
    for bb in range(1, min(batch, max_bb) + 1):
        if batch % bb == 0 and batch // bb >= 2:
            best = bb
    return best


def init_params(key, in_channels, conv_layers, mode="default"):
    """Synthetic init mirroring the PyTorch module (weights in PyTorch layout)."""
    # TODO(synk): conv_groups > 1 (grouped conv on layer 0), mode='layer_norm'
    # (Fp32LayerNorm) and dropout > 0 are not implemented (default config only).
    params = []
    in_d = in_channels
    for i, (dim, t, f) in enumerate(conv_layers):            # `f` unused by the 1D module
        key, wkey = jax.random.split(key)
        fan_in = in_d * 3
        std = (2.0 / fan_in) ** 0.5                          # kaiming_normal_, fan_in mode
        w_pt = jax.random.normal(wkey, (dim, in_d, 3), jnp.float32) * std  # (Cout, Cin, k)
        params.append(dict(
            w_pt=w_pt,
            gamma=jnp.ones((1, dim), jnp.float32),           # GroupNorm affine init
            beta=jnp.zeros((1, dim), jnp.float32),
            t=int(t),
            use_gn=(mode == "default" and i == 0),           # group norm only on layer 0
        ))
        in_d = dim
    return params


def conv_pool1d_feature_extractor(x_ncl, params, max_bb=8):
    """Forward pass of ConvPool1DFeatureExtractionChModel (mode='default')."""
    B, Cin, L0 = x_ncl.shape
    bb = _pick_batch_block(B, max_bb)
    nb = B // bb

    # Boundary layout glue: NCL -> (B*L, C) so channels sit on TPU lanes and
    # the bb samples of each grid step stack into the matmul M dimension.
    x2 = jnp.transpose(x_ncl, (0, 2, 1)).astype(jnp.float32).reshape(B * L0, Cin)

    cfgs = []
    inputs = [x2]
    in_specs = [pl.BlockSpec((bb * L0, Cin), lambda b: (b, 0))]
    l_cur, c_cur = L0, Cin
    for p in params:
        w_pt = p["w_pt"]                                     # (Cout, Cin, k) PyTorch layout
        cout = int(w_pt.shape[0])
        # per-tap matrices W_j = weight[:, :, j].T  -> stacked (k, Cin, Cout), bf16 for MXU
        w_taps = jnp.transpose(w_pt, (2, 1, 0)).astype(jnp.bfloat16)
        inputs.append(w_taps)
        in_specs.append(pl.BlockSpec(tuple(w_taps.shape), lambda b: (0, 0, 0)))
        if p["use_gn"]:
            inputs += [p["gamma"], p["beta"]]
            in_specs += [pl.BlockSpec((1, cout), lambda b: (0, 0)),
                         pl.BlockSpec((1, cout), lambda b: (0, 0))]
        cfgs.append((p["t"], p["use_gn"]))
        l_cur = l_cur // p["t"]
        c_cur = cout

    # Lane-dense output packing: write (rows, 128) slabs when possible so the
    # final store is unmasked; the wrapper reshapes back afterwards.
    blk_elems = bb * l_cur * c_cur
    if c_cur < 128 and 128 % c_cur == 0 and blk_elems % 128 == 0:
        out_block = (blk_elems // 128, 128)
    else:
        out_block = (bb * l_cur, c_cur)

    kernel = functools.partial(_fused_kernel, cfgs=tuple(cfgs), bb=bb, l0=L0)
    y = pl.pallas_call(
        kernel,
        grid=(nb,),                                          # batch-blocked grid
        out_shape=jax.ShapeDtypeStruct((nb,) + out_block, jnp.float32),
        in_specs=in_specs,
        out_specs=pl.BlockSpec((None,) + out_block, lambda b: (b, 0, 0)),
        compiler_params=pltpu.CompilerParams(
            dimension_semantics=("parallel",),               # dual-TC split on v7x
            vmem_limit_bytes=32 * 1024 * 1024),
        # TODO(synk): at realistic sizes (long L, C<=512, ~7 layers) re-derive the
        # per-step VMEM budget for v7x's 64 MiB (L-tile with a 1-row halo and/or
        # single-buffer the grid-invariant weight blocks).
    )(*inputs)

    y = y.reshape(B, l_cur, c_cur)                           # undo lane-dense packing
    return jnp.transpose(y, (0, 2, 1))                       # PyTorch NCL output (B, C, L_out)


# ----------------------------- pure-JAX reference -----------------------------
def _gelu_exact(x):
    return 0.5 * x * (1.0 + lax.erf(x * _SQRT_HALF))


def _reference(x_ncl, params):
    x = jnp.transpose(x_ncl, (0, 2, 1)).astype(jnp.float32)  # (B, L, C)
    for p in params:
        w = jnp.transpose(p["w_pt"], (2, 1, 0))              # (k, Cin, Cout) "WIO"
        y = lax.conv_general_dilated(
            x, w, window_strides=(1,), padding=((1, 1),),
            dimension_numbers=("NWC", "WIO", "NWC"),
            precision=lax.Precision.HIGHEST)
        if p["use_gn"]:
            mean = jnp.mean(y, axis=1, keepdims=True)
            var = jnp.mean(jnp.square(y - mean), axis=1, keepdims=True)
            y = (y - mean) * lax.rsqrt(var + 1e-5)
            y = y * p["gamma"][None] + p["beta"][None]
        Bq, Lq, Cq = y.shape
        t = p["t"]
        lo = Lq // t
        y = y[:, :lo * t, :].reshape(Bq, lo, t, Cq).max(axis=2)
        x = _gelu_exact(y)
    return jnp.transpose(x, (0, 2, 1))


if __name__ == "__main__":
    key = jax.random.PRNGKey(0)
    kx, kp = jax.random.split(key)

    # Module config: in_channels=4, conv_layers=[(32, 2, 2), (32, 2, 2)],
    # mode='default', conv_bias=False, conv_groups=1, dropout=0.0.
    B, Cin, L = 2, 4, 16
    conv_layers = [(32, 2, 2), (32, 2, 2)]

    x = jax.random.normal(kx, (B, Cin, L), jnp.float32)      # (B, C, L) like PyTorch input
    params = init_params(kp, Cin, conv_layers)

    fwd = jax.jit(lambda inp: conv_pool1d_feature_extractor(inp, params))
    out = jax.block_until_ready(fwd(x))

    C_last = conv_layers[-1][0]
    assert out.shape == (B, C_last, L // 4), out.shape

    ref = jax.block_until_ready(_reference(x, params))
    # bf16 MXU operands vs the f32 XLA reference: tolerance sized to the bf16
    # truncation error while still catching any structural error (taps / GN /
    # pooling / layout).
    np.testing.assert_allclose(np.asarray(out), np.asarray(ref), rtol=2e-2, atol=2.5e-2)

    print("KERNEL_OK")
</pallas_src>

<mosaic_0001>
module attributes {stable_mosaic.version = 11 : i64} {
  func.func @_fused_kernel(%arg0: i32, %arg1: memref<16x4xf32, #tpu.memory_space<vmem>>, %arg2: memref<3x4x32xbf16, #tpu.memory_space<vmem>>, %arg3: memref<1x32xf32, #tpu.memory_space<vmem>>, %arg4: memref<1x32xf32, #tpu.memory_space<vmem>>, %arg5: memref<3x32x32xbf16, #tpu.memory_space<vmem>>, %arg6: memref<1x1x128xf32, #tpu.memory_space<vmem>>) attributes {dimension_semantics = [#tpu.dimension_semantics<parallel>], iteration_bounds = array<i64: 2>, scalar_prefetch = 0 : i64, scratch_operands = 0 : i64, tpu.core_type = #tpu.core_type<tc>, window_params = [{transform_indices = @transform_0, window_bounds = array<i64: 16, 4>}, {pipeline_mode = #tpu.pipeline_mode<synchronous>, transform_indices = @transform_1, window_bounds = array<i64: 3, 4, 32>}, {pipeline_mode = #tpu.pipeline_mode<synchronous>, transform_indices = @transform_2, window_bounds = array<i64: 1, 32>}, {pipeline_mode = #tpu.pipeline_mode<synchronous>, transform_indices = @transform_3, window_bounds = array<i64: 1, 32>}, {pipeline_mode = #tpu.pipeline_mode<synchronous>, transform_indices = @transform_4, window_bounds = array<i64: 3, 32, 32>}, {transform_indices = @transform_5, window_bounds = array<i64: 1, 1, 128>}]} {
    %c0 = arith.constant 0 : index
    %c0_0 = arith.constant 0 : index
    %0 = vector.load %arg1[%c0, %c0_0] : memref<16x4xf32, #tpu.memory_space<vmem>>, vector<16x4xf32>
    %1 = arith.truncf %0 : vector<16x4xf32> to vector<16x4xbf16>
    %c0_1 = arith.constant 0 : index
    %c0_2 = arith.constant 0 : index
    %c0_3 = arith.constant 0 : index
    %2 = vector.load %arg2[%c0_1, %c0_2, %c0_3] : memref<3x4x32xbf16, #tpu.memory_space<vmem>>, vector<1x4x32xbf16>
    %3 = vector.shape_cast %2 : vector<1x4x32xbf16> to vector<4x32xbf16>
    %cst = arith.constant dense<0.000000e+00> : vector<16x32xf32>
    %4 = tpu.matmul %1, %3, %cst {dimension_numbers = #tpu.dot_dimension_numbers<[1], [0], [0], [1], [0, 0, 1, 1], [], []>} : vector<16x4xbf16>, vector<4x32xbf16>, vector<16x32xf32> -> vector<16x32xf32>
    %c1 = arith.constant 1 : index
    %c0_4 = arith.constant 0 : index
    %c0_5 = arith.constant 0 : index
    %5 = vector.load %arg2[%c1, %c0_4, %c0_5] : memref<3x4x32xbf16, #tpu.memory_space<vmem>>, vector<1x4x32xbf16>
    %6 = vector.shape_cast %5 : vector<1x4x32xbf16> to vector<4x32xbf16>
    %cst_6 = arith.constant dense<0.000000e+00> : vector<16x32xf32>
    %7 = tpu.matmul %1, %6, %cst_6 {dimension_numbers = #tpu.dot_dimension_numbers<[1], [0], [0], [1], [0, 0, 1, 1], [], []>} : vector<16x4xbf16>, vector<4x32xbf16>, vector<16x32xf32> -> vector<16x32xf32>
    %c2 = arith.constant 2 : index
    %c0_7 = arith.constant 0 : index
    %c0_8 = arith.constant 0 : index
    %8 = vector.load %arg2[%c2, %c0_7, %c0_8] : memref<3x4x32xbf16, #tpu.memory_space<vmem>>, vector<1x4x32xbf16>
    %9 = vector.shape_cast %8 : vector<1x4x32xbf16> to vector<4x32xbf16>
    %cst_9 = arith.constant dense<0.000000e+00> : vector<16x32xf32>
    %10 = tpu.matmul %1, %9, %cst_9 {dimension_numbers = #tpu.dot_dimension_numbers<[1], [0], [0], [1], [0, 0, 1, 1], [], []>} : vector<16x4xbf16>, vector<4x32xbf16>, vector<16x32xf32> -> vector<16x32xf32>
    %11 = tpu.iota {dimensions = array<i32: 0>} : vector<16x1xi32>
    %c16_i32 = arith.constant 16 : i32
    %c0_i32 = arith.constant 0 : i32
    %12 = arith.cmpi eq, %c16_i32, %c0_i32 : i32
    %c1_i32 = arith.constant 1 : i32
    %13 = arith.select %12, %c1_i32, %c16_i32 : i32
    %14 = vector.broadcast %13 : i32 to vector<16x1xi32>
    %15 = arith.remsi %11, %14 : vector<16x1xi32>
    %c0_i32_10 = arith.constant 0 : i32
    %16 = vector.broadcast %c0_i32_10 : i32 to vector<16x1xi32>
    %17 = arith.cmpi ne, %15, %16 : vector<16x1xi32>
    %c0_i32_11 = arith.constant 0 : i32
    %18 = vector.broadcast %c0_i32_11 : i32 to vector<16x1xi32>
    %19 = arith.cmpi slt, %15, %18 : vector<16x1xi32>
    %c0_i32_12 = arith.constant 0 : i32
    %20 = arith.cmpi slt, %13, %c0_i32_12 : i32
    %21 = vector.broadcast %20 : i1 to vector<16x1xi1>
    %22 = vector.broadcast %21 : vector<16x1xi1> to vector<16x1xi1>
    %23 = arith.xori %19, %22 : vector<16x1xi1>
    %24 = arith.andi %23, %17 : vector<16x1xi1>
    %25 = vector.broadcast %13 : i32 to vector<16x1xi32>
    %26 = arith.addi %15, %25 : vector<16x1xi32>
    %27 = arith.select %24, %26, %15 : vector<16x1xi1>, vector<16x1xi32>
    %c0_i32_13 = arith.constant 0 : i32
    %28 = vector.broadcast %c0_i32_13 : i32 to vector<16x1xi32>
    %29 = arith.cmpi eq, %27, %28 : vector<16x1xi32>
    %c16_i32_14 = arith.constant 16 : i32
    %c0_i32_15 = arith.constant 0 : i32
    %30 = arith.cmpi eq, %c16_i32_14, %c0_i32_15 : i32
    %c1_i32_16 = arith.constant 1 : i32
    %31 = arith.select %30, %c1_i32_16, %c16_i32_14 : i32
    %32 = vector.broadcast %31 : i32 to vector<16x1xi32>
    %33 = arith.remsi %11, %32 : vector<16x1xi32>
    %c0_i32_17 = arith.constant 0 : i32
    %34 = vector.broadcast %c0_i32_17 : i32 to vector<16x1xi32>
    %35 = arith.cmpi ne, %33, %34 : vector<16x1xi32>
    %c0_i32_18 = arith.constant 0 : i32
    %36 = vector.broadcast %c0_i32_18 : i32 to vector<16x1xi32>
    %37 = arith.cmpi slt, %33, %36 : vector<16x1xi32>
    %c0_i32_19 = arith.constant 0 : i32
    %38 = arith.cmpi slt, %31, %c0_i32_19 : i32
    %39 = vector.broadcast %38 : i1 to vector<16x1xi1>
    %40 = vector.broadcast %39 : vector<16x1xi1> to vector<16x1xi1>
    %41 = arith.xori %37, %40 : vector<16x1xi1>
    %42 = arith.andi %41, %35 : vector<16x1xi1>
    %43 = vector.broadcast %31 : i32 to vector<16x1xi32>
    %44 = arith.addi %33, %43 : vector<16x1xi32>
    %45 = arith.select %42, %44, %33 : vector<16x1xi1>, vector<16x1xi32>
    %c15_i32 = arith.constant 15 : i32
    %46 = vector.broadcast %c15_i32 : i32 to vector<16x1xi32>
    %47 = arith.cmpi eq, %45, %46 : vector<16x1xi32>
    %c1_i32_20 = arith.constant 1 : i32
    %48 = tpu.dynamic_rotate %4 by %c1_i32_20 dim 0 : vector<16x32xf32>, i32 -> vector<16x32xf32>
    %c15_i32_21 = arith.constant 15 : i32
    %49 = tpu.dynamic_rotate %10 by %c15_i32_21 dim 0 : vector<16x32xf32>, i32 -> vector<16x32xf32>
    %cst_22 = arith.constant 0.000000e+00 : f32
    %50 = vector.shape_cast %29 : vector<16x1xi1> to vector<16x1xi1>
    %51 = vector.broadcast %50 : vector<16x1xi1> to vector<16x32xi1>
    %52 = vector.broadcast %cst_22 : f32 to vector<16x32xf32>
    %53 = arith.select %51, %52, %48 : vector<16x32xi1>, vector<16x32xf32>
    %54 = arith.addf %7, %53 : vector<16x32xf32>
    %cst_23 = arith.constant 0.000000e+00 : f32
    %55 = vector.shape_cast %47 : vector<16x1xi1> to vector<16x1xi1>
    %56 = vector.broadcast %55 : vector<16x1xi1> to vector<16x32xi1>
    %57 = vector.broadcast %cst_23 : f32 to vector<16x32xf32>
    %58 = arith.select %56, %57, %49 : vector<16x32xi1>, vector<16x32xf32>
    %59 = arith.addf %54, %58 : vector<16x32xf32>
    %c0_24 = arith.constant 0 : index
    %c0_25 = arith.constant 0 : index
    %60 = vector.load %arg3[%c0_24, %c0_25] : memref<1x32xf32, #tpu.memory_space<vmem>>, vector<1x32xf32>
    %c0_26 = arith.constant 0 : index
    %c0_27 = arith.constant 0 : index
    %61 = vector.load %arg4[%c0_26, %c0_27] : memref<1x32xf32, #tpu.memory_space<vmem>>, vector<1x32xf32>
    %cst_28 = arith.constant dense<0.000000e+00> : vector<32xf32>
    %62 = vector.multi_reduction <add>, %59, %cst_28 [0] : vector<16x32xf32> to vector<32xf32>
    %63 = vector.shape_cast %62 : vector<32xf32> to vector<1x32xf32>
    %cst_29 = arith.constant 1.600000e+01 : f32
    %64 = vector.broadcast %cst_29 : f32 to vector<1x32xf32>
    %65 = arith.divf %63, %64 : vector<1x32xf32>
    %66 = vector.broadcast %65 : vector<1x32xf32> to vector<16x32xf32>
    %67 = arith.subf %59, %66 : vector<16x32xf32>
    %68 = arith.mulf %67, %67 : vector<16x32xf32>
    %cst_30 = arith.constant dense<0.000000e+00> : vector<32xf32>
    %69 = vector.multi_reduction <add>, %68, %cst_30 [0] : vector<16x32xf32> to vector<32xf32>
    %70 = vector.shape_cast %69 : vector<32xf32> to vector<1x32xf32>
    %cst_31 = arith.constant 1.600000e+01 : f32
    %71 = vector.broadcast %cst_31 : f32 to vector<1x32xf32>
    %72 = arith.divf %70, %71 : vector<1x32xf32>
    %cst_32 = arith.constant 9.99999974E-6 : f32
    %73 = vector.broadcast %cst_32 : f32 to vector<1x32xf32>
    %74 = arith.addf %72, %73 : vector<1x32xf32>
    %75 = math.rsqrt %74 : vector<1x32xf32>
    %76 = vector.broadcast %75 : vector<1x32xf32> to vector<16x32xf32>
    %77 = arith.mulf %67, %76 : vector<16x32xf32>
    %78 = vector.broadcast %60 : vector<1x32xf32> to vector<16x32xf32>
    %79 = arith.mulf %77, %78 : vector<16x32xf32>
    %80 = vector.broadcast %61 : vector<1x32xf32> to vector<16x32xf32>
    %81 = arith.addf %79, %80 : vector<16x32xf32>
    %c15_i32_33 = arith.constant 15 : i32
    %82 = tpu.dynamic_rotate %81 by %c15_i32_33 dim 0 : vector<16x32xf32>, i32 -> vector<16x32xf32>
    %83 = arith.maximumf %81, %82 : vector<16x32xf32>
    %84 = vector.shape_cast %83 : vector<16x32xf32> to vector<8x2x32xf32>
    %85 = vector.extract_strided_slice %84 {offsets = [0, 0, 0], sizes = [8, 1, 32], strides = [1, 1, 1]} : vector<8x2x32xf32> to vector<8x1x32xf32>
    %86 = vector.shape_cast %85 : vector<8x1x32xf32> to vector<8x32xf32>
    %cst_34 = arith.constant 0.707106769 : f32
    %87 = vector.broadcast %cst_34 : f32 to vector<8x32xf32>
    %88 = arith.mulf %86, %87 : vector<8x32xf32>
    %89 = math.absf %88 : vector<8x32xf32>
    %cst_35 = arith.constant 0.327591091 : f32
    %90 = vector.broadcast %cst_35 : f32 to vector<8x32xf32>
    %91 = arith.mulf %90, %89 : vector<8x32xf32>
    %cst_36 = arith.constant 1.000000e+00 : f32
    %92 = vector.broadcast %cst_36 : f32 to vector<8x32xf32>
    %93 = arith.addf %92, %91 : vector<8x32xf32>
    %94 = tpu.reciprocal %93 {approx = true} : vector<8x32xf32> -> vector<8x32xf32>
    %cst_37 = arith.constant 1.06140542 : f32
    %95 = vector.broadcast %cst_37 : f32 to vector<8x32xf32>
    %96 = arith.mulf %95, %94 : vector<8x32xf32>
    %cst_38 = arith.constant -1.45315206 : f32
    %97 = vector.broadcast %cst_38 : f32 to vector<8x32xf32>
    %98 = arith.addf %96, %97 : vector<8x32xf32>
    %99 = arith.mulf %98, %94 : vector<8x32xf32>
    %cst_39 = arith.constant 1.42141378 : f32
    %100 = vector.broadcast %cst_39 : f32 to vector<8x32xf32>
    %101 = arith.addf %99, %100 : vector<8x32xf32>
    %102 = arith.mulf %101, %94 : vector<8x32xf32>
    %cst_40 = arith.constant -0.284496725 : f32
    %103 = vector.broadcast %cst_40 : f32 to vector<8x32xf32>
    %104 = arith.addf %102, %103 : vector<8x32xf32>
    %105 = arith.mulf %104, %94 : vector<8x32xf32>
    %cst_41 = arith.constant 0.254829586 : f32
    %106 = vector.broadcast %cst_41 : f32 to vector<8x32xf32>
    %107 = arith.addf %105, %106 : vector<8x32xf32>
    %108 = arith.mulf %107, %94 : vector<8x32xf32>
    %cst_42 = arith.constant 0.000000e+00 : f32
    %109 = vector.broadcast %cst_42 : f32 to vector<8x32xf32>
    %110 = arith.subf %109, %89 : vector<8x32xf32>
    %111 = arith.mulf %110, %89 : vector<8x32xf32>
    %112 = math.exp %111 : vector<8x32xf32>
    %113 = arith.mulf %108, %112 : vector<8x32xf32>
    %cst_43 = arith.constant 1.000000e+00 : f32
    %114 = vector.broadcast %cst_43 : f32 to vector<8x32xf32>
    %115 = arith.subf %114, %113 : vector<8x32xf32>
    %cst_44 = arith.constant 0.000000e+00 : f32
    %116 = vector.broadcast %cst_44 : f32 to vector<8x32xf32>
    %117 = arith.cmpf oge, %88, %116 : vector<8x32xf32>
    %cst_45 = arith.constant 0.000000e+00 : f32
    %118 = vector.broadcast %cst_45 : f32 to vector<8x32xf32>
    %119 = arith.subf %118, %115 : vector<8x32xf32>
    %120 = arith.select %117, %115, %119 : vector<8x32xi1>, vector<8x32xf32>
    %cst_46 = arith.constant 5.000000e-01 : f32
    %121 = vector.broadcast %cst_46 : f32 to vector<8x32xf32>
    %122 = arith.mulf %121, %86 : vector<8x32xf32>
    %cst_47 = arith.constant 1.000000e+00 : f32
    %123 = vector.broadcast %cst_47 : f32 to vector<8x32xf32>
    %124 = arith.addf %123, %120 : vector<8x32xf32>
    %125 = arith.mulf %122, %124 : vector<8x32xf32>
    %126 = arith.truncf %125 : vector<8x32xf32> to vector<8x32xbf16>
    %c0_48 = arith.constant 0 : index
    %c0_49 = arith.constant 0 : index
    %c0_50 = arith.constant 0 : index
    %127 = vector.load %arg5[%c0_48, %c0_49, %c0_50] : memref<3x32x32xbf16, #tpu.memory_space<vmem>>, vector<1x32x32xbf16>
    %128 = vector.shape_cast %127 : vector<1x32x32xbf16> to vector<32x32xbf16>
    %cst_51 = arith.constant dense<0.000000e+00> : vector<8x32xf32>
    %129 = tpu.matmul %126, %128, %cst_51 {dimension_numbers = #tpu.dot_dimension_numbers<[1], [0], [0], [1], [0, 0, 1, 1], [], []>} : vector<8x32xbf16>, vector<32x32xbf16>, vector<8x32xf32> -> vector<8x32xf32>
    %c1_52 = arith.constant 1 : index
    %c0_53 = arith.constant 0 : index
    %c0_54 = arith.constant 0 : index
    %130 = vector.load %arg5[%c1_52, %c0_53, %c0_54] : memref<3x32x32xbf16, #tpu.memory_space<vmem>>, vector<1x32x32xbf16>
    %131 = vector.shape_cast %130 : vector<1x32x32xbf16> to vector<32x32xbf16>
    %cst_55 = arith.constant dense<0.000000e+00> : vector<8x32xf32>
    %132 = tpu.matmul %126, %131, %cst_55 {dimension_numbers = #tpu.dot_dimension_numbers<[1], [0], [0], [1], [0, 0, 1, 1], [], []>} : vector<8x32xbf16>, vector<32x32xbf16>, vector<8x32xf32> -> vector<8x32xf32>
    %c2_56 = arith.constant 2 : index
    %c0_57 = arith.constant 0 : index
    %c0_58 = arith.constant 0 : index
    %133 = vector.load %arg5[%c2_56, %c0_57, %c0_58] : memref<3x32x32xbf16, #tpu.memory_space<vmem>>, vector<1x32x32xbf16>
    %134 = vector.shape_cast %133 : vector<1x32x32xbf16> to vector<32x32xbf16>
    %cst_59 = arith.constant dense<0.000000e+00> : vector<8x32xf32>
    %135 = tpu.matmul %126, %134, %cst_59 {dimension_numbers = #tpu.dot_dimension_numbers<[1], [0], [0], [1], [0, 0, 1, 1], [], []>} : vector<8x32xbf16>, vector<32x32xbf16>, vector<8x32xf32> -> vector<8x32xf32>
    %136 = tpu.iota {dimensions = array<i32: 0>} : vector<8x1xi32>
    %c8_i32 = arith.constant 8 : i32
    %c0_i32_60 = arith.constant 0 : i32
    %137 = arith.cmpi eq, %c8_i32, %c0_i32_60 : i32
    %c1_i32_61 = arith.constant 1 : i32
    %138 = arith.select %137, %c1_i32_61, %c8_i32 : i32
    %139 = vector.broadcast %138 : i32 to vector<8x1xi32>
    %140 = arith.remsi %136, %139 : vector<8x1xi32>
    %c0_i32_62 = arith.constant 0 : i32
    %141 = vector.broadcast %c0_i32_62 : i32 to vector<8x1xi32>
    %142 = arith.cmpi ne, %140, %141 : vector<8x1xi32>
    %c0_i32_63 = arith.constant 0 : i32
    %143 = vector.broadcast %c0_i32_63 : i32 to vector<8x1xi32>
    %144 = arith.cmpi slt, %140, %143 : vector<8x1xi32>
    %c0_i32_64 = arith.constant 0 : i32
    %145 = arith.cmpi slt, %138, %c0_i32_64 : i32
    %146 = vector.broadcast %145 : i1 to vector<8x1xi1>
    %147 = vector.broadcast %146 : vector<8x1xi1> to vector<8x1xi1>
    %148 = arith.xori %144, %147 : vector<8x1xi1>
    %149 = arith.andi %148, %142 : vector<8x1xi1>
    %150 = vector.broadcast %138 : i32 to vector<8x1xi32>
    %151 = arith.addi %140, %150 : vector<8x1xi32>
    %152 = arith.select %149, %151, %140 : vector<8x1xi1>, vector<8x1xi32>
    %c0_i32_65 = arith.constant 0 : i32
    %153 = vector.broadcast %c0_i32_65 : i32 to vector<8x1xi32>
    %154 = arith.cmpi eq, %152, %153 : vector<8x1xi32>
    %c8_i32_66 = arith.constant 8 : i32
    %c0_i32_67 = arith.constant 0 : i32
    %155 = arith.cmpi eq, %c8_i32_66, %c0_i32_67 : i32
    %c1_i32_68 = arith.constant 1 : i32
    %156 = arith.select %155, %c1_i32_68, %c8_i32_66 : i32
    %157 = vector.broadcast %156 : i32 to vector<8x1xi32>
    %158 = arith.remsi %136, %157 : vector<8x1xi32>
    %c0_i32_69 = arith.constant 0 : i32
    %159 = vector.broadcast %c0_i32_69 : i32 to vector<8x1xi32>
    %160 = arith.cmpi ne, %158, %159 : vector<8x1xi32>
    %c0_i32_70 = arith.constant 0 : i32
    %161 = vector.broadcast %c0_i32_70 : i32 to vector<8x1xi32>
    %162 = arith.cmpi slt, %158, %161 : vector<8x1xi32>
    %c0_i32_71 = arith.constant 0 : i32
    %163 = arith.cmpi slt, %156, %c0_i32_71 : i32
    %164 = vector.broadcast %163 : i1 to vector<8x1xi1>
    %165 = vector.broadcast %164 : vector<8x1xi1> to vector<8x1xi1>
    %166 = arith.xori %162, %165 : vector<8x1xi1>
    %167 = arith.andi %166, %160 : vector<8x1xi1>
    %168 = vector.broadcast %156 : i32 to vector<8x1xi32>
    %169 = arith.addi %158, %168 : vector<8x1xi32>
    %170 = arith.select %167, %169, %158 : vector<8x1xi1>, vector<8x1xi32>
    %c7_i32 = arith.constant 7 : i32
    %171 = vector.broadcast %c7_i32 : i32 to vector<8x1xi32>
    %172 = arith.cmpi eq, %170, %171 : vector<8x1xi32>
    %c1_i32_72 = arith.constant 1 : i32
    %173 = tpu.dynamic_rotate %129 by %c1_i32_72 dim 0 : vector<8x32xf32>, i32 -> vector<8x32xf32>
    %c7_i32_73 = arith.constant 7 : i32
    %174 = tpu.dynamic_rotate %135 by %c7_i32_73 dim 0 : vector<8x32xf32>, i32 -> vector<8x32xf32>
    %cst_74 = arith.constant 0.000000e+00 : f32
    %175 = vector.shape_cast %154 : vector<8x1xi1> to vector<8x1xi1>
    %176 = vector.broadcast %175 : vector<8x1xi1> to vector<8x32xi1>
    %177 = vector.broadcast %cst_74 : f32 to vector<8x32xf32>
    %178 = arith.select %176, %177, %173 : vector<8x32xi1>, vector<8x32xf32>
    %179 = arith.addf %132, %178 : vector<8x32xf32>
    %cst_75 = arith.constant 0.000000e+00 : f32
    %180 = vector.shape_cast %172 : vector<8x1xi1> to vector<8x1xi1>
    %181 = vector.broadcast %180 : vector<8x1xi1> to vector<8x32xi1>
    %182 = vector.broadcast %cst_75 : f32 to vector<8x32xf32>
    %183 = arith.select %181, %182, %174 : vector<8x32xi1>, vector<8x32xf32>
    %184 = arith.addf %179, %183 : vector<8x32xf32>
    %c7_i32_76 = arith.constant 7 : i32
    %185 = tpu.dynamic_rotate %184 by %c7_i32_76 dim 0 : vector<8x32xf32>, i32 -> vector<8x32xf32>
    %186 = arith.maximumf %184, %185 : vector<8x32xf32>
    %187 = vector.shape_cast %186 : vector<8x32xf32> to vector<4x2x32xf32>
    %188 = vector.extract_strided_slice %187 {offsets = [0, 0, 0], sizes = [4, 1, 32], strides = [1, 1, 1]} : vector<4x2x32xf32> to vector<4x1x32xf32>
    %189 = vector.shape_cast %188 : vector<4x1x32xf32> to vector<4x32xf32>
    %cst_77 = arith.constant 0.707106769 : f32
    %190 = vector.broadcast %cst_77 : f32 to vector<4x32xf32>
    %191 = arith.mulf %189, %190 : vector<4x32xf32>
    %192 = math.absf %191 : vector<4x32xf32>
    %cst_78 = arith.constant 0.327591091 : f32
    %193 = vector.broadcast %cst_78 : f32 to vector<4x32xf32>
    %194 = arith.mulf %193, %192 : vector<4x32xf32>
    %cst_79 = arith.constant 1.000000e+00 : f32
    %195 = vector.broadcast %cst_79 : f32 to vector<4x32xf32>
    %196 = arith.addf %195, %194 : vector<4x32xf32>
    %197 = tpu.reciprocal %196 {approx = true} : vector<4x32xf32> -> vector<4x32xf32>
    %cst_80 = arith.constant 1.06140542 : f32
    %198 = vector.broadcast %cst_80 : f32 to vector<4x32xf32>
    %199 = arith.mulf %198, %197 : vector<4x32xf32>
    %cst_81 = arith.constant -1.45315206 : f32
    %200 = vector.broadcast %cst_81 : f32 to vector<4x32xf32>
    %201 = arith.addf %199, %200 : vector<4x32xf32>
    %202 = arith.mulf %201, %197 : vector<4x32xf32>
    %cst_82 = arith.constant 1.42141378 : f32
    %203 = vector.broadcast %cst_82 : f32 to vector<4x32xf32>
    %204 = arith.addf %202, %203 : vector<4x32xf32>
    %205 = arith.mulf %204, %197 : vector<4x32xf32>
    %cst_83 = arith.constant -0.284496725 : f32
    %206 = vector.broadcast %cst_83 : f32 to vector<4x32xf32>
    %207 = arith.addf %205, %206 : vector<4x32xf32>
    %208 = arith.mulf %207, %197 : vector<4x32xf32>
    %cst_84 = arith.constant 0.254829586 : f32
    %209 = vector.broadcast %cst_84 : f32 to vector<4x32xf32>
    %210 = arith.addf %208, %209 : vector<4x32xf32>
    %211 = arith.mulf %210, %197 : vector<4x32xf32>
    %cst_85 = arith.constant 0.000000e+00 : f32
    %212 = vector.broadcast %cst_85 : f32 to vector<4x32xf32>
    %213 = arith.subf %212, %192 : vector<4x32xf32>
    %214 = arith.mulf %213, %192 : vector<4x32xf32>
    %215 = math.exp %214 : vector<4x32xf32>
    %216 = arith.mulf %211, %215 : vector<4x32xf32>
    %cst_86 = arith.constant 1.000000e+00 : f32
    %217 = vector.broadcast %cst_86 : f32 to vector<4x32xf32>
    %218 = arith.subf %217, %216 : vector<4x32xf32>
    %cst_87 = arith.constant 0.000000e+00 : f32
    %219 = vector.broadcast %cst_87 : f32 to vector<4x32xf32>
    %220 = arith.cmpf oge, %191, %219 : vector<4x32xf32>
    %cst_88 = arith.constant 0.000000e+00 : f32
    %221 = vector.broadcast %cst_88 : f32 to vector<4x32xf32>
    %222 = arith.subf %221, %218 : vector<4x32xf32>
    %223 = arith.select %220, %218, %222 : vector<4x32xi1>, vector<4x32xf32>
    %cst_89 = arith.constant 5.000000e-01 : f32
    %224 = vector.broadcast %cst_89 : f32 to vector<4x32xf32>
    %225 = arith.mulf %224, %189 : vector<4x32xf32>
    %cst_90 = arith.constant 1.000000e+00 : f32
    %226 = vector.broadcast %cst_90 : f32 to vector<4x32xf32>
    %227 = arith.addf %226, %223 : vector<4x32xf32>
    %228 = arith.mulf %225, %227 : vector<4x32xf32>
    %229 = vector.extract_strided_slice %228 {offsets = [0, 0], sizes = [1, 32], strides = [1, 1]} : vector<4x32xf32> to vector<1x32xf32>
    %230 = vector.extract_strided_slice %228 {offsets = [1, 0], sizes = [1, 32], strides = [1, 1]} : vector<4x32xf32> to vector<1x32xf32>
    %231 = vector.extract_strided_slice %228 {offsets = [2, 0], sizes = [1, 32], strides = [1, 1]} : vector<4x32xf32> to vector<1x32xf32>
    %232 = vector.extract_strided_slice %228 {offsets = [3, 0], sizes = [1, 32], strides = [1, 1]} : vector<4x32xf32> to vector<1x32xf32>
    %233 = tpu.concatenate %229, %230, %231, %232 in 1 : vector<1x32xf32>, vector<1x32xf32>, vector<1x32xf32>, vector<1x32xf32> -> vector<1x128xf32>
    %c0_91 = arith.constant 0 : index
    %c0_92 = arith.constant 0 : index
    %c0_93 = arith.constant 0 : index
    %234 = vector.load %arg6[%c0_91, %c0_92, %c0_93] : memref<1x1x128xf32, #tpu.memory_space<vmem>>, vector<1x1x128xf32>
    %235 = vector.shape_cast %234 : vector<1x1x128xf32> to vector<1x128xf32>
    %236 = vector.shape_cast %233 : vector<1x128xf32> to vector<1x1x128xf32>
    tpu.vector_store %arg6[%c0_91, %c0_92, %c0_93], %236 {strides = array<i32>} : memref<1x1x128xf32, #tpu.memory_space<vmem>>, vector<1x1x128xf32>,
    return
  }
  func.func @transform_0(%arg0: i32) -> (i32, i32) {
    %c0_i32 = arith.constant 0 : i32
    %c0_i32_0 = arith.constant 0 : i32
    return %arg0, %c0_i32 : i32, i32
  }
  func.func @transform_1(%arg0: i32) -> (i32, i32, i32) {
    %c0_i32 = arith.constant 0 : i32
    %c0_i32_0 = arith.constant 0 : i32
    %c0_i32_1 = arith.constant 0 : i32
    %c0_i32_2 = arith.constant 0 : i32
    return %c0_i32, %c0_i32_0, %c0_i32_1 : i32, i32, i32
  }
  func.func @transform_2(%arg0: i32) -> (i32, i32) {
    %c0_i32 = arith.constant 0 : i32
    %c0_i32_0 = arith.constant 0 : i32
    %c0_i32_1 = arith.constant 0 : i32
    return %c0_i32, %c0_i32_0 : i32, i32
  }
  func.func @transform_3(%arg0: i32) -> (i32, i32) {
    %c0_i32 = arith.constant 0 : i32
    %c0_i32_0 = arith.constant 0 : i32
    %c0_i32_1 = arith.constant 0 : i32
    return %c0_i32, %c0_i32_0 : i32, i32
  }
  func.func @transform_4(%arg0: i32) -> (i32, i32, i32) {
    %c0_i32 = arith.constant 0 : i32
    %c0_i32_0 = arith.constant 0 : i32
    %c0_i32_1 = arith.constant 0 : i32
    %c0_i32_2 = arith.constant 0 : i32
    return %c0_i32, %c0_i32_0, %c0_i32_1 : i32, i32, i32
  }
  func.func @transform_5(%arg0: i32) -> (i32, i32, i32) {
    %c0_i32 = arith.constant 0 : i32
    %c0_i32_0 = arith.constant 0 : i32
    %c0_i32_1 = arith.constant 0 : i32
    return %arg0, %c0_i32, %c0_i32_0 : i32, i32, i32
  }
}

</mosaic_0001>

<llo_original>
// kernel: _lambda_.1
$region0: #{_lambda_.1}
  #allocation0 [shape = 'u32[]', space=smem, size = 0x4, offset = 0x4, fixed_abs, tag = 'smem constant byte address 0x4 - core index']
  #allocation1 [shape = 'u32[144,128]{1,0:T(1,128)}', space=vmem, size = 0x12000, scoped, tag = 'internal scratch']
  %s0 = inlined_call_operand.vmem [shape: f32[32,4], index: 0, kind: input, shape index: {}]
  %s1 = inlined_call_operand.vmem [shape: bf16[3,4,32], index: 1, kind: input, shape index: {}]
  %s2 = inlined_call_operand.vmem [shape: f32[1,32], index: 2, kind: input, shape index: {}]
  %s3 = inlined_call_operand.vmem [shape: f32[1,32], index: 3, kind: input, shape index: {}]
  %s4 = inlined_call_operand.vmem [shape: bf16[3,32,32], index: 4, kind: input, shape index: {}]
  %s5 = inlined_call_operand.vmem [shape: f32[2,1,128], index: 5, kind: output, shape index: {}]
  %s6 = sld [smem:[#allocation0]]
  $region53: #{_lambda_.1} parent=0
    _
  %s8 = ssub.s32 1, %s6
  %s9 = scalar_select 0, %s8, %s6
  loop: start=0, step=1, limit=4
  $region2: #{_lambda_.1} parent=0 // loop_pre_header
    _
  $region3: #{_lambda_.1} parent=0 // loop_header
    %s11 = sphi 0, %s15
    %p12 = scmp.ge.s32.totalorder %s11, 4
    %s21 = sphi 0, %s23
    %s24 = sphi 0, %s21
    %s25 = sphi 0, %s24
    %s41 = sphi 0, %s25
    %s45 = sphi 0, %s45
    %s47 = sphi 0, %s45
    %s48 = sphi 0, %s47
    %s62 = sphi 0, %s48
    %s66 = sphi 0, %s66
    %s68 = sphi 0, %s66
    %s69 = sphi 0, %s68
    %s83 = sphi 0, %s69
    %s87 = sphi 0, %s87
    %s89 = sphi 0, %s87
    %s90 = sphi 0, %s89
    %s104 = sphi 0, %s90
    %s108 = sphi 0, %s108
    %s110 = sphi 0, %s108
    %s111 = sphi 0, %s110
    %s125 = sphi 0, %s111
    %s131 = sphi 0, %s133
    %s134 = sphi 0, %s131
    %s135 = sphi 0, %s134
    %s151 = sphi 0, %s135
  $region4: #{_lambda_.1} parent=0 // loop_header_branch
    %14 = sbr.rel (%p12) target = $region8
  $region5: #{_lambda_.1} parent=0 // loop_body
    %s16 = ssub.s32 %s11, 1
    %s17 = ssub.s32 %s11, 2
    %s18 = sadd.s32 %s11, 1
    %s19 = ssub.s32 %s11, %s18
    %p20 = scmp.eq.s32.totalorder %s19, 0
    %s22 = sadd.s32 %s21, 1
    %s23 = scalar_select %p20, %s21, %s22
    %p26 = pneg %p20
    %p27 = scmp.eq.s32.totalorder %s11, 1
    %p28 = por %p26, %p27
    %p29 = scmp.ne.s32.totalorder %s21, %s24
    %p30 = scmp.eq.s32.totalorder %s11, 0
    %p31 = por %p29, %p30
    %p32 = scmp.ne.s32.totalorder %s21, %s24
    %p33 = scmp.eq.s32.totalorder %s16, 1
    %p34 = por %p32, %p33
    %p35 = scmp.ne.s32.totalorder %s24, %s25
    %p36 = scmp.eq.s32.totalorder %s16, 0
    %p37 = por %p35, %p36
    %p38 = scmp.ne.s32.totalorder %s24, %s25
    %p39 = scmp.eq.s32.totalorder %s17, 1
    %p40 = por %p38, %p39
    %p42 = scmp.ne.s32.totalorder %s25, %s41
    %p43 = scmp.eq.s32.totalorder %s17, 0
    %p44 = por %p42, %p43
    %s46 = sadd.s32 %s45, 1
    %p49 = scmp.eq.s32.totalorder %s11, 1
    %p50 = scmp.ne.s32.totalorder %s45, %s47
    %p51 = scmp.eq.s32.totalorder %s11, 0
    %p52 = por %p50, %p51
    %p53 = scmp.ne.s32.totalorder %s45, %s47
    %p54 = scmp.eq.s32.totalorder %s16, 1
    %p55 = por %p53, %p54
    %p56 = scmp.ne.s32.totalorder %s47, %s48
    %p57 = scmp.eq.s32.totalorder %s16, 0
    %p58 = por %p56, %p57
    %p59 = scmp.ne.s32.totalorder %s47, %s48
    %p60 = scmp.eq.s32.totalorder %s17, 1
    %p61 = por %p59, %p60
    %p63 = scmp.ne.s32.totalorder %s48, %s62
    %p64 = scmp.eq.s32.totalorder %s17, 0
    %p65 = por %p63, %p64
    %s67 = sadd.s32 %s66, 1
    %p70 = scmp.eq.s32.totalorder %s11, 1
    %p71 = scmp.ne.s32.totalorder %s66, %s68
    %p72 = scmp.eq.s32.totalorder %s11, 0
    %p73 = por %p71, %p72
    %p74 = scmp.ne.s32.totalorder %s66, %s68
    %p75 = scmp.eq.s32.totalorder %s16, 1
    %p76 = por %p74, %p75
    %p77 = scmp.ne.s32.totalorder %s68, %s69
    %p78 = scmp.eq.s32.totalorder %s16, 0
    %p79 = por %p77, %p78
    %p80 = scmp.ne.s32.totalorder %s68, %s69
    %p81 = scmp.eq.s32.totalorder %s17, 1
    %p82 = por %p80, %p81
    %p84 = scmp.ne.s32.totalorder %s69, %s83
    %p85 = scmp.eq.s32.totalorder %s17, 0
    %p86 = por %p84, %p85
    %s88 = sadd.s32 %s87, 1
    %p91 = scmp.eq.s32.totalorder %s11, 1
    %p92 = scmp.ne.s32.totalorder %s87, %s89
    %p93 = scmp.eq.s32.totalorder %s11, 0
    %p94 = por %p92, %p93
    %p95 = scmp.ne.s32.totalorder %s87, %s89
    %p96 = scmp.eq.s32.totalorder %s16, 1
    %p97 = por %p95, %p96
    %p98 = scmp.ne.s32.totalorder %s89, %s90
    %p99 = scmp.eq.s32.totalorder %s16, 0
    %p100 = por %p98, %p99
    %p101 = scmp.ne.s32.totalorder %s89, %s90
    %p102 = scmp.eq.s32.totalorder %s17, 1
    %p103 = por %p101, %p102
    %p105 = scmp.ne.s32.totalorder %s90, %s104
    %p106 = scmp.eq.s32.totalorder %s17, 0
    %p107 = por %p105, %p106
    %s109 = sadd.s32 %s108, 1
    %p112 = scmp.eq.s32.totalorder %s11, 1
    %p113 = scmp.ne.s32.totalorder %s108, %s110
    %p114 = scmp.eq.s32.totalorder %s11, 0
    %p115 = por %p113, %p114
    %p116 = scmp.ne.s32.totalorder %s108, %s110
    %p117 = scmp.eq.s32.totalorder %s16, 1
    %p118 = por %p116, %p117
    %p119 = scmp.ne.s32.totalorder %s110, %s111
    %p120 = scmp.eq.s32.totalorder %s16, 0
    %p121 = por %p119, %p120
    %p122 = scmp.ne.s32.totalorder %s110, %s111
    %p123 = scmp.eq.s32.totalorder %s17, 1
    %p124 = por %p122, %p123
    %p126 = scmp.ne.s32.totalorder %s111, %s125
    %p127 = scmp.eq.s32.totalorder %s17, 0
    %p128 = por %p126, %p127
    %s129 = ssub.s32 %s11, %s18
    %p130 = scmp.eq.s32.totalorder %s129, 0
    %s132 = sadd.s32 %s131, 1
    %s133 = scalar_select %p130, %s131, %s132
    %p136 = pneg %p130
    %p137 = scmp.eq.s32.totalorder %s11, 1
    %p138 = por %p136, %p137
    %p139 = scmp.ne.s32.totalorder %s131, %s134
    %p140 = scmp.eq.s32.totalorder %s11, 0
    %p141 = por %p139, %p140
    %p142 = scmp.ne.s32.totalorder %s131, %s134
    %p143 = scmp.eq.s32.totalorder %s16, 1
    %p144 = por %p142, %p143
    %p145 = scmp.ne.s32.totalorder %s134, %s135
    %p146 = scmp.eq.s32.totalorder %s16, 0
    %p147 = por %p145, %p146
    %p148 = scmp.ne.s32.totalorder %s134, %s135
    %p149 = scmp.eq.s32.totalorder %s17, 1
    %p150 = por %p148, %p149
    %p152 = scmp.ne.s32.totalorder %s135, %s151
    %p153 = scmp.eq.s32.totalorder %s17, 0
    %p154 = por %p152, %p153
    %p155 = scmp.le.s32.totalorder 1, %s11
    %p156 = scmp.lt.s32.totalorder %s11, 3
    %p157 = pnand %p155, %p156
    %p158 = pneg %p157
    // Predicated region
    $region9: #{_lambda_.1} parent=5 // pred_check
      _
    $region10: #{_lambda_.1} parent=5 // pred_check_branch
      %160 = sbr.rel (%p157) target = $region12
    $region11: #{_lambda_.1} parent=5 // pred_region
      %s161 = ssub.s32 %s11, 1
      // Predicated region
      $region13: #{_lambda_.1} parent=11 // pred_check
        %p162 = pneg %p58
      $region14: #{_lambda_.1} parent=11 // pred_check_branch
        %164 = sbr.rel (%p162) target = $region16
      $region15: #{_lambda_.1} parent=11 // pred_region
        _
      $region16: #{_lambda_.1} parent=11 // pred_fallthru
        _
      // Predicated region
      $region17: #{_lambda_.1} parent=11 // pred_check
        %p165 = pneg %p79
      $region18: #{_lambda_.1} parent=11 // pred_check_branch
        %167 = sbr.rel (%p165) target = $region20
      $region19: #{_lambda_.1} parent=11 // pred_region
        _
      $region20: #{_lambda_.1} parent=11 // pred_fallthru
        _
      // Predicated region
      $region21: #{_lambda_.1} parent=11 // pred_check
        %p168 = pneg %p100
      $region22: #{_lambda_.1} parent=11 // pred_check_branch
        %170 = sbr.rel (%p168) target = $region24
      $region23: #{_lambda_.1} parent=11 // pred_region
        _
      $region24: #{_lambda_.1} parent=11 // pred_fallthru
        _
      // Predicated region
      $region25: #{_lambda_.1} parent=11 // pred_check
        %p171 = pneg %p121
      $region26: #{_lambda_.1} parent=11 // pred_check_branch
        %173 = sbr.rel (%p171) target = $region28
      $region27: #{_lambda_.1} parent=11 // pred_region
        _
      $region28: #{_lambda_.1} parent=11 // pred_fallthru
        _
    $region12: #{_lambda_.1} parent=5 // pred_fallthru
      _
    %p174 = scmp.lt.s32.totalorder %s11, 2
    // Predicated region
    $region29: #{_lambda_.1} parent=5 // pred_check
      %p175 = pneg %p174
    $region30: #{_lambda_.1} parent=5 // pred_check_branch
      %177 = sbr.rel (%p175) target = $region32
    $region31: #{_lambda_.1} parent=5 // pred_region
      // Predicated region
      $region33: #{_lambda_.1} parent=31 // pred_check
        %p178 = pneg %p31
      $region34: #{_lambda_.1} parent=31 // pred_check_branch
        %180 = sbr.rel (%p178) target = $region36
      $region35: #{_lambda_.1} parent=31 // pred_region
        %s181 = smul.u32 2, %s11
        %p182 = scmp.lt.s32.totalorder %s181, 3
        %s183 = scalar_select %p182, %s181, 3
        %s184 = smul.addr %s183, 8
        %s185 = scalar_lea.vmem %s0, %s184
        %s186 = smul.u32 2, %s11
      $region36: #{_lambda_.1} parent=31 // pred_fallthru
        _
    $region32: #{_lambda_.1} parent=5 // pred_fallthru
      _
    %p187 = scmp.le.s32.totalorder 1, %s11
    %p188 = scmp.lt.s32.totalorder %s11, 3
    %p189 = pnand %p187, %p188
    %p190 = pneg %p189
    // Predicated region
    $region37: #{_lambda_.1} parent=5 // pred_check
      _
    $region38: #{_lambda_.1} parent=5 // pred_check_branch
      %192 = sbr.rel (%p189) target = $region40
    $region39: #{_lambda_.1} parent=5 // pred_region
      %s193 = ssub.s32 %s11, 1
      %s194 = smul.u32 2, %s16
      %p195 = scmp.lt.s32.totalorder %s194, 3
      %s196 = scalar_select %p195, %s194, 3
      %s197 = smul.addr %s196, 8
      %s198 = scalar_lea.vmem %s0, %s197
      %p199 = pneg %p37
      %p200 = pneg %p34
      %p201 = pneg %p58
      %p202 = pneg %p55
      %p203 = pneg %p79
      %p204 = pneg %p76
      %p205 = pneg %p100
      %p206 = pneg %p97
      %p207 = pneg %p121
      %p208 = pneg %p118
      %p209 = pneg %p147
      %p210 = pneg %p144
      %p211 = scmp.lt.s32.totalorder %s16, 1
      %s212 = scalar_select %p211, %s16, 1
      %s213 = scalar_lea.vmem %s5, %s212
      %s214 = smul.u32 2, %s16
      %p215 = scmp.lt.s32.totalorder %s214, 3
      %s216 = scalar_select %p215, %s214, 3
      %s217 = smul.addr %s216, 8
      %s218 = scalar_lea.vmem %s0, %s217
      %s219 = smul.u32 2, %s16
      %p220 = scmp.lt.s32.totalorder %s16, 1
      %s221 = scalar_select %p220, %s16, 1
      %s222 = scalar_lea.vmem %s5, %s221
      %v224 = vld [vmem:[%s218] sm:$0xff]
      %v225 = vld [vmem:[%s218 + $0x8] sm:$0xff]
      %v226 = vpack.c.bf16 %v225, %v224
      %v227 = vld [vmem:[%s1] sm:$0x3]
      %vm228 = vcmask 31744
      %v230 = vsel %vm228, %v226, 0
      %vm232 = vcmask 1041408
      %v234 = vsel %vm232, %v227, 0
      %236 = vmatprep.subr.bf16.mxu0 0
      %237 = vmatpush1.bf16.msra.mxu0 %v234
      %238 = vmatprep.subr.bf16.mxu0 0
      %239 = vmatpush1.bf16.msra.mxu0 0
      %240 = vmatprep.subr.bf16.mxu0 0
      %241 = vmatpush1.bf16.msra.mxu0 0
      %242 = vmatprep.subr.bf16.mxu0 0
      %243 = vmatpush1.bf16.msra.mxu0 0
      %244 = vmatprep.subr.bf16.mxu0 0
      %245 = vmatpush1.bf16.msra.mxu0 0
      %246 = vmatprep.subr.bf16.mxu0 0
      %247 = vmatpush1.bf16.msra.mxu0 0
      %248 = vmatprep.subr.bf16.mxu0 0
      %249 = vmatpush1.bf16.msra.mxu0 0
      %250 = vmatprep.subr.bf16.mxu0 0
      %251 = vmatpush1.bf16.msra.mxu0 0
      %252 = vmatprep.subr.bf16.mxu0 0
      %253 = vmatpush1.bf16.msra.mxu0 0
      %254 = vmatprep.subr.bf16.mxu0 0
      %255 = vmatpush1.bf16.msra.mxu0 0
      %256 = vmatprep.subr.bf16.mxu0 0
      %257 = vmatpush1.bf16.msra.mxu0 0
      %258 = vmatprep.subr.bf16.mxu0 0
      %259 = vmatpush1.bf16.msra.mxu0 0
      %260 = vmatprep.subr.bf16.mxu0 0
      %261 = vmatpush1.bf16.msra.mxu0 0
      %262 = vmatprep.subr.bf16.mxu0 0
      %263 = vmatpush1.bf16.msra.mxu0 0
      %264 = vmatprep.subr.bf16.mxu0 0
      %265 = vmatpush1.bf16.msra.mxu0 0
      %266 = vmatprep.subr.bf16.mxu0 0
      %267 = vmatpush1.bf16.msra.mxu0 0
      %268 = vmatprep.mubr.bf16.mxu0 0
      %269 = vmatmul.mubr.bf16.gmra.mrb[0].mxu0 %v230
      %v270 = vpop.f32.mrb[0].mxu0
      %v271 = vadd.f32 0.0, %v270
      %v272 = vpop.f32.mrb[0].mxu0
      %v273 = vpop.f32.mrb[0].mxu0
      %v274 = vadd.f32 0.0, %v273
      %v275 = vpop.f32.mrb[0].mxu0
      %276 = vdwg.mxu0
      %s277 = scalar_lea.vmem %s1, 2
      %v278 = vld [vmem:[%s277] sm:$0x3]
      %s279 = scalar_lea.vmem %s1, 4
      %v280 = vld [vmem:[%s279] sm:$0x3]
      %v282 = vsel %vm232, %v280, 0
      %284 = vmatprep.subr.bf16.mxu0 0
      %285 = vmatpush1.bf16.msra.mxu0 %v282
      %286 = vmatprep.subr.bf16.mxu0 0
      %287 = vmatpush1.bf16.msra.mxu0 0
      %288 = vmatprep.subr.bf16.mxu0 0
      %289 = vmatpush1.bf16.msra.mxu0 0
      %290 = vmatprep.subr.bf16.mxu0 0
      %291 = vmatpush1.bf16.msra.mxu0 0
      %292 = vmatprep.subr.bf16.mxu0 0
      %293 = vmatpush1.bf16.msra.mxu0 0
      %294 = vmatprep.subr.bf16.mxu0 0
      %295 = vmatpush1.bf16.msra.mxu0 0
      %296 = vmatprep.subr.bf16.mxu0 0
      %297 = vmatpush1.bf16.msra.mxu0 0
      %298 = vmatprep.subr.bf16.mxu0 0
      %299 = vmatpush1.bf16.msra.mxu0 0
      %300 = vmatprep.subr.bf16.mxu0 0
      %301 = vmatpush1.bf16.msra.mxu0 0
      %302 = vmatprep.subr.bf16.mxu0 0
      %303 = vmatpush1.bf16.msra.mxu0 0
      %304 = vmatprep.subr.bf16.mxu0 0
      %305 = vmatpush1.bf16.msra.mxu0 0
      %306 = vmatprep.subr.bf16.mxu0 0
      %307 = vmatpush1.bf16.msra.mxu0 0
      %308 = vmatprep.subr.bf16.mxu0 0
      %309 = vmatpush1.bf16.msra.mxu0 0
      %310 = vmatprep.subr.bf16.mxu0 0
      %311 = vmatpush1.bf16.msra.mxu0 0
      %312 = vmatprep.subr.bf16.mxu0 0
      %313 = vmatpush1.bf16.msra.mxu0 0
      %314 = vmatprep.subr.bf16.mxu0 0
      %315 = vmatpush1.bf16.msra.mxu0 0
      %316 = vmatprep.mubr.bf16.mxu0 0
      %317 = vmatmul.mubr.bf16.gmra.mrb[0].mxu0 %v230
      %v318 = vpop.f32.mrb[0].mxu0
      %v319 = vadd.f32 0.0, %v318
      %v320 = vpop.f32.mrb[0].mxu0
      %v321 = vpop.f32.mrb[0].mxu0
      %v322 = vadd.f32 0.0, %v321
      %v323 = vpop.f32.mrb[0].mxu0
      %324 = vdwg.mxu0
      %v325 = vlaneseq
      %v326 = vshrl.u32 %v325, 7
      %v327 = vadd.s32 %v326, 8
      %vm328 = vcmp.lt.s32.totalorder %v326, 0
      %v329 = vsub.s32 0, %v326
      %v330 = vsel %vm328, %v329, %v326
      %v331 = vshrl.u32 %v330, 4
      %v332 = vand.u32 %v330, 15
      %v333 = vsub.s32 0, %v332
      %v334 = vsel %vm328, %v333, %v332
      %vm335 = vcmp.lt.s32.totalorder %v327, 0
      %v336 = vsub.s32 0, %v327
      %v337 = vsel %vm335, %v336, %v327
      %v338 = vshrl.u32 %v337, 4
      %v339 = vand.u32 %v337, 15
      %v340 = vsub.s32 0, %v339
      %v341 = vsel %vm335, %v340, %v339
      %vm342 = vcmp.ne.s32.totalorder %v334, 0
      %vm343 = vcmp.ne.s32.totalorder %v341, 0
      %vm344 = vcmp.lt.s32.totalorder %v334, 0
      %vm345 = vcmp.lt.s32.totalorder %v341, 0
      %vm346 = vmand %vm344, %vm342
      %vm347 = vmand %vm345, %vm343
      %v348 = vadd.s32 %v334, 16
      %v349 = vadd.s32 %v341, 16
      %v350 = vsel %vm346, %v348, %v334
      %v351 = vsel %vm347, %v349, %v341
      %vm352 = vcmp.eq.s32.totalorder %v350, 0
      %vm353 = vcmp.eq.s32.totalorder %v351, 0
      %vm354 = vcmp.eq.s32.totalorder %v350, 15
      %vm355 = vcmp.eq.s32.totalorder %v351, 15
      %v356 = vrot.slane %v271, 7
      %v357 = vrot.slane %v274, 7
      %vm358 = vcmp.lt.s32.totalorder %v326, 1
      %v359 = vsel %vm358, %v356, %v357
      %v360 = vsel %vm358, %v357, %v356
      %v361 = vrot.slane %v319, 1
      %v362 = vrot.slane %v322, 1
      %vm363 = vcmp.lt.s32.totalorder %v326, 7
      %v364 = vsel %vm363, %v361, %v362
      %v365 = vsel %vm363, %v362, %v361
      %v366 = vsel %vm352, 1, 0
      %v367 = vsel %vm353, 1, 0
      %vm368 = vcmp.eq.s32.totalorder %v366, 1
      %vm369 = vcmp.eq.s32.totalorder %v367, 1
      %v370 = vsel %vm368, 0.0, %v360
      %v371 = vsel %vm369, 0.0, %v359
      %v373 = vsel %vm232, %v278, 0
      %375 = vmatprep.subr.bf16.mxu0 0
      %376 = vmatpush1.bf16.msra.mxu0 %v373
      %377 = vmatprep.subr.bf16.mxu0 0
      %378 = vmatpush1.bf16.msra.mxu0 0
      %379 = vmatprep.subr.bf16.mxu0 0
      %380 = vmatpush1.bf16.msra.mxu0 0
      %381 = vmatprep.subr.bf16.mxu0 0
      %382 = vmatpush1.bf16.msra.mxu0 0
      %383 = vmatprep.subr.bf16.mxu0 0
      %384 = vmatpush1.bf16.msra.mxu0 0
      %385 = vmatprep.subr.bf16.mxu0 0
      %386 = vmatpush1.bf16.msra.mxu0 0
      %387 = vmatprep.subr.bf16.mxu0 0
      %388 = vmatpush1.bf16.msra.mxu0 0
      %389 = vmatprep.subr.bf16.mxu0 0
      %390 = vmatpush1.bf16.msra.mxu0 0
      %391 = vmatprep.subr.bf16.mxu0 0
      %392 = vmatpush1.bf16.msra.mxu0 0
      %393 = vmatprep.subr.bf16.mxu0 0
      %394 = vmatpush1.bf16.msra.mxu0 0
      %395 = vmatprep.subr.bf16.mxu0 0
      %396 = vmatpush1.bf16.msra.mxu0 0
      %397 = vmatprep.subr.bf16.mxu0 0
      %398 = vmatpush1.bf16.msra.mxu0 0
      %399 = vmatprep.subr.bf16.mxu0 0
      %400 = vmatpush1.bf16.msra.mxu0 0
      %401 = vmatprep.subr.bf16.mxu0 0
      %402 = vmatpush1.bf16.msra.mxu0 0
      %403 = vmatprep.subr.bf16.mxu0 0
      %404 = vmatpush1.bf16.msra.mxu0 0
      %405 = vmatprep.subr.bf16.mxu0 0
      %406 = vmatpush1.bf16.msra.mxu0 0
      %407 = vmatprep.mubr.bf16.mxu0 0
      %408 = vmatmul.mubr.bf16.gmra.mrb[0].mxu0 %v230
      %v409 = vpop.f32.mrb[0].mxu0
      %v410 = vadd.f32 %v370, %v409
      %v411 = vpop.f32.mrb[0].mxu0
      %v412 = vpop.f32.mrb[0].mxu0
      %v413 = vadd.f32 %v371, %v412
      %v414 = vpop.f32.mrb[0].mxu0
      %415 = vdwg.mxu0
      %v416 = vsel %vm354, 1, 0
      %v417 = vsel %vm355, 1, 0
      %vm418 = vcmp.eq.s32.totalorder %v416, 1
      %vm419 = vcmp.eq.s32.totalorder %v417, 1
      %v420 = vsel %vm418, 0.0, %v364
      %v421 = vsel %vm419, 0.0, %v365
      %v422 = vadd.f32 %v410, %v420
      %v423 = vadd.f32 %v413, %v421
      %v424 = vld [vmem:[%s2] sm:$0x1]
      %v425 = vld [vmem:[%s3] sm:$0x1]
      %vm426 = vcmask 261120
      %v427 = vsel %vm426, %v422, 0.0
      %v428 = vsel %vm426, %v423, 0.0
      %v429 = vadd.f32 %v427, %v428
      %v430 = vrot.slane %v429, 4
      %v431 = vadd.f32 %v429, %v430
      %v432 = vrot.slane %v431, 2
      %v433 = vadd.f32 %v431, %v432
      %v434 = vrot.slane %v433, 1
      %v435 = vadd.f32 %v433, %v434
      %v436 = vrcp.pop 16.0
      %v437 = vmul.f32 %v435, %v436
      %v438 = vsub.f32 %v422, %v437
      %v439 = vsub.f32 %v423, %v437
      %v440 = vmul.f32 %v438, %v438
      %v441 = vmul.f32 %v439, %v439
      %v442 = vsel %vm426, %v440, 0.0
      %v443 = vsel %vm426, %v441, 0.0
      %v444 = vadd.f32 %v442, %v443
      %v445 = vrot.slane %v444, 4
      %v446 = vadd.f32 %v444, %v445
      %v447 = vrot.slane %v446, 2
      %v448 = vadd.f32 %v446, %v447
      %v449 = vrot.slane %v448, 1
      %v450 = vadd.f32 %v448, %v449
      %v451 = vmul.f32 %v450, %v436
      %v452 = vadd.f32 %v451, 1e-05
      %v453 = vrsqrt.pop %v452
      %v454 = vmul.f32 %v438, %v453
      %v455 = vmul.f32 %v439, %v453
      %v457 = vlaneseq
      %v458 = vshrl.u32 %v457, 7
      %v459 = vsub.s32 0, %v458
      %v460 = vrot.slane %v424, %v459
      %v462 = vmul.f32 %v454, %v460
      %v463 = vmul.f32 %v455, %v460
      %v465 = vlaneseq
      %v466 = vshrl.u32 %v465, 7
      %v467 = vsub.s32 0, %v466
      %v468 = vrot.slane %v425, %v467
      %v470 = vadd.f32 %v462, %v468
      %v471 = vadd.f32 %v463, %v468
      %v472 = vrot.slane %v470, 1
      %v473 = vrot.slane %v471, 1
      %v474 = vsel %vm363, %v472, %v473
      %v475 = vsel %vm363, %v473, %v472
      %v476 = vmax.f32 %v470, %v474
      %v477 = vmax.f32 %v471, %v475
      %v480 = vcombine.high %v476, %v476
      %v482 = vunpack.c.l.s4 1983009808
      %v483 = vunpack.c.0.s8 %v482
      %v484 = vlaneseq
      %v485 = vshrl.u32 %v484, 7
      %v486 = vsub.s32 %v483, %v485
      %v487 = vrot.slane %v476, %v486
      %v489 = vunpack.c.l.s4 1983009808
      %v490 = vunpack.c.0.s8 %v489
      %v491 = vlaneseq
      %v492 = vshrl.u32 %v491, 7
      %v493 = vsub.s32 %v490, %v492
      %v494 = vrot.slane %v480, %v493
      %v495 = vcombine.high %v487, %v487
      %v496 = vcombine.high %v494, %v494
      %v497 = vcombine.high %v477, %v477
      %v499 = vunpack.c.l.s4 1983009808
      %v500 = vunpack.c.0.s8 %v499
      %v501 = vlaneseq
      %v502 = vshrl.u32 %v501, 7
      %v503 = vsub.s32 %v500, %v502
      %v504 = vrot.slane %v477, %v503
      %v506 = vunpack.c.l.s4 1983009808
      %v507 = vunpack.c.0.s8 %v506
      %v508 = vlaneseq
      %v509 = vshrl.u32 %v508, 7
      %v510 = vsub.s32 %v507, %v509
      %v511 = vrot.slane %v497, %v510
      %v512 = vcombine.high %v504, %v504
      %v513 = vcombine.high %v511, %v511
      %v522 = vmul.f32 %v487, 0.70710677
      %v523 = vmul.f32 %v495, 0.70710677
      %v524 = vmul.f32 %v494, 0.70710677
      %v525 = vmul.f32 %v496, 0.70710677
      %v526 = vmul.f32 %v504, 0.70710677
      %v527 = vmul.f32 %v512, 0.70710677
      %v528 = vmul.f32 %v511, 0.70710677
      %v529 = vmul.f32 %v513, 0.70710677
      %v530 = vand.u32 2147483647, %v522
      %v531 = vand.u32 2147483647, %v523
      %v532 = vand.u32 2147483647, %v524
      %v533 = vand.u32 2147483647, %v525
      %v534 = vand.u32 2147483647, %v526
      %v535 = vand.u32 2147483647, %v527
      %v536 = vand.u32 2147483647, %v528
      %v537 = vand.u32 2147483647, %v529
      %v538 = vmul.f32 %v530, 0.3275911
      %v539 = vmul.f32 %v531, 0.3275911
      %v540 = vmul.f32 %v532, 0.3275911
      %v541 = vmul.f32 %v533, 0.3275911
      %v542 = vmul.f32 %v534, 0.3275911
      %v543 = vmul.f32 %v535, 0.3275911
      %v544 = vmul.f32 %v536, 0.3275911
      %v545 = vmul.f32 %v537, 0.3275911
      %v546 = vadd.f32 %v538, 1.0
      %v547 = vadd.f32 %v539, 1.0
      %v548 = vadd.f32 %v540, 1.0
      %v549 = vadd.f32 %v541, 1.0
      %v550 = vadd.f32 %v542, 1.0
      %v551 = vadd.f32 %v543, 1.0
      %v552 = vadd.f32 %v544, 1.0
      %v553 = vadd.f32 %v545, 1.0
      %v554 = vrcp.pop %v546
      %v555 = vrcp.pop %v547
      %v556 = vrcp.pop %v548
      %v557 = vrcp.pop %v549
      %v558 = vrcp.pop %v550
      %v559 = vrcp.pop %v551
      %v560 = vrcp.pop %v552
      %v561 = vrcp.pop %v553
      %v562 = vmul.f32 %v554, 1.0614054
      %v563 = vmul.f32 %v555, 1.0614054
      %v564 = vmul.f32 %v556, 1.0614054
      %v565 = vmul.f32 %v557, 1.0614054
      %v566 = vmul.f32 %v558, 1.0614054
      %v567 = vmul.f32 %v559, 1.0614054
      %v568 = vmul.f32 %v560, 1.0614054
      %v569 = vmul.f32 %v561, 1.0614054
      %v570 = vadd.f32 %v562, -1.4531521
      %v571 = vadd.f32 %v563, -1.4531521
      %v572 = vadd.f32 %v564, -1.4531521
      %v573 = vadd.f32 %v565, -1.4531521
      %v574 = vadd.f32 %v566, -1.4531521
      %v575 = vadd.f32 %v567, -1.4531521
      %v576 = vadd.f32 %v568, -1.4531521
      %v577 = vadd.f32 %v569, -1.4531521
      %v578 = vmul.f32 %v570, %v554
      %v579 = vmul.f32 %v571, %v555
      %v580 = vmul.f32 %v572, %v556
      %v581 = vmul.f32 %v573, %v557
      %v582 = vmul.f32 %v574, %v558
      %v583 = vmul.f32 %v575, %v559
      %v584 = vmul.f32 %v576, %v560
      %v585 = vmul.f32 %v577, %v561
      %v586 = vadd.f32 %v578, 1.4214138
      %v587 = vadd.f32 %v579, 1.4214138
      %v588 = vadd.f32 %v580, 1.4214138
      %v589 = vadd.f32 %v581, 1.4214138
      %v590 = vadd.f32 %v582, 1.4214138
      %v591 = vadd.f32 %v583, 1.4214138
      %v592 = vadd.f32 %v584, 1.4214138
      %v593 = vadd.f32 %v585, 1.4214138
      %v594 = vmul.f32 %v586, %v554
      %v595 = vmul.f32 %v587, %v555
      %v596 = vmul.f32 %v588, %v556
      %v597 = vmul.f32 %v589, %v557
      %v598 = vmul.f32 %v590, %v558
      %v599 = vmul.f32 %v591, %v559
      %v600 = vmul.f32 %v592, %v560
      %v601 = vmul.f32 %v593, %v561
      %v602 = vadd.f32 %v594, -0.28449672
      %v603 = vadd.f32 %v595, -0.28449672
      %v604 = vadd.f32 %v596, -0.28449672
      %v605 = vadd.f32 %v597, -0.28449672
      %v606 = vadd.f32 %v598, -0.28449672
      %v607 = vadd.f32 %v599, -0.28449672
      %v608 = vadd.f32 %v600, -0.28449672
      %v609 = vadd.f32 %v601, -0.28449672
      %v610 = vmul.f32 %v602, %v554
      %v611 = vmul.f32 %v603, %v555
      %v612 = vmul.f32 %v604, %v556
      %v613 = vmul.f32 %v605, %v557
      %v614 = vmul.f32 %v606, %v558
      %v615 = vmul.f32 %v607, %v559
      %v616 = vmul.f32 %v608, %v560
      %v617 = vmul.f32 %v609, %v561
      %v618 = vadd.f32 %v610, 0.2548296
      %v619 = vadd.f32 %v611, 0.2548296
      %v620 = vadd.f32 %v612, 0.2548296
      %v621 = vadd.f32 %v613, 0.2548296
      %v622 = vadd.f32 %v614, 0.2548296
      %v623 = vadd.f32 %v615, 0.2548296
      %v624 = vadd.f32 %v616, 0.2548296
      %v625 = vadd.f32 %v617, 0.2548296
      %v626 = vmul.f32 %v618, %v554
      %v627 = vmul.f32 %v619, %v555
      %v628 = vmul.f32 %v620, %v556
      %v629 = vmul.f32 %v621, %v557
      %v630 = vmul.f32 %v622, %v558
      %v631 = vmul.f32 %v623, %v559
      %v632 = vmul.f32 %v624, %v560
      %v633 = vmul.f32 %v625, %v561
      %v634 = vsub.f32 0.0, %v530
      %v635 = vsub.f32 0.0, %v531
      %v636 = vsub.f32 0.0, %v532
      %v637 = vsub.f32 0.0, %v533
      %v638 = vsub.f32 0.0, %v534
      %v639 = vsub.f32 0.0, %v535
      %v640 = vsub.f32 0.0, %v536
      %v641 = vsub.f32 0.0, %v537
      %v642 = vmul.f32 %v634, %v530
      %v643 = vmul.f32 %v635, %v531
      %v644 = vmul.f32 %v636, %v532
      %v645 = vmul.f32 %v637, %v533
      %v646 = vmul.f32 %v638, %v534
      %v647 = vmul.f32 %v639, %v535
      %v648 = vmul.f32 %v640, %v536
      %v649 = vmul.f32 %v641, %v537
      %v650 = vmul.f32 %v642, 1.442695
      %v651 = vpow.pop %v650
      %v652 = vmul.f32 %v643, 1.442695
      %v653 = vpow.pop %v652
      %v654 = vmul.f32 %v644, 1.442695
      %v655 = vpow.pop %v654
      %v656 = vmul.f32 %v645, 1.442695
      %v657 = vpow.pop %v656
      %v658 = vmul.f32 %v646, 1.442695
      %v659 = vpow.pop %v658
      %v660 = vmul.f32 %v647, 1.442695
      %v661 = vpow.pop %v660
      %v662 = vmul.f32 %v648, 1.442695
      %v663 = vpow.pop %v662
      %v664 = vmul.f32 %v649, 1.442695
      %v665 = vpow.pop %v664
      %v666 = vmul.f32 %v626, %v651
      %v667 = vmul.f32 %v627, %v653
      %v668 = vmul.f32 %v628, %v655
      %v669 = vmul.f32 %v629, %v657
      %v670 = vmul.f32 %v630, %v659
      %v671 = vmul.f32 %v631, %v661
      %v672 = vmul.f32 %v632, %v663
      %v673 = vmul.f32 %v633, %v665
      %v674 = vsub.f32 1.0, %v666
      %v675 = vsub.f32 1.0, %v667
      %v676 = vsub.f32 1.0, %v668
      %v677 = vsub.f32 1.0, %v669
      %v678 = vsub.f32 1.0, %v670
      %v679 = vsub.f32 1.0, %v671
      %v680 = vsub.f32 1.0, %v672
      %v681 = vsub.f32 1.0, %v673
      %vm682 = vcmp.ge.f32.partialorder %v522, 0.0
      %vm683 = vcmp.ge.f32.partialorder %v523, 0.0
      %vm684 = vcmp.ge.f32.partialorder %v524, 0.0
      %vm685 = vcmp.ge.f32.partialorder %v525, 0.0
      %vm686 = vcmp.ge.f32.partialorder %v526, 0.0
      %vm687 = vcmp.ge.f32.partialorder %v527, 0.0
      %vm688 = vcmp.ge.f32.partialorder %v528, 0.0
      %vm689 = vcmp.ge.f32.partialorder %v529, 0.0
      %v690 = vsub.f32 0.0, %v674
      %v691 = vsub.f32 0.0, %v675
      %v692 = vsub.f32 0.0, %v676
      %v693 = vsub.f32 0.0, %v677
      %v694 = vsub.f32 0.0, %v678
      %v695 = vsub.f32 0.0, %v679
      %v696 = vsub.f32 0.0, %v680
      %v697 = vsub.f32 0.0, %v681
      %v698 = vsel %vm682, %v674, %v690
      %v699 = vsel %vm683, %v675, %v691
      %v700 = vsel %vm684, %v676, %v692
      %v701 = vsel %vm685, %v677, %v693
      %v702 = vsel %vm686, %v678, %v694
      %v703 = vsel %vm687, %v679, %v695
      %v704 = vsel %vm688, %v680, %v696
      %v705 = vsel %vm689, %v681, %v697
      %v706 = vmul.f32 %v487, 0.5
      %v707 = vmul.f32 %v495, 0.5
      %v708 = vmul.f32 %v494, 0.5
      %v709 = vmul.f32 %v496, 0.5
      %v710 = vmul.f32 %v504, 0.5
      %v711 = vmul.f32 %v512, 0.5
      %v712 = vmul.f32 %v511, 0.5
      %v713 = vmul.f32 %v513, 0.5
      %v714 = vadd.f32 %v698, 1.0
      %v715 = vadd.f32 %v699, 1.0
      %v716 = vadd.f32 %v700, 1.0
      %v717 = vadd.f32 %v701, 1.0
      %v718 = vadd.f32 %v702, 1.0
      %v719 = vadd.f32 %v703, 1.0
      %v720 = vadd.f32 %v704, 1.0
      %v721 = vadd.f32 %v705, 1.0
      %v722 = vmul.f32 %v706, %v714
      %v723 = vmul.f32 %v707, %v715
      %v724 = vmul.f32 %v708, %v716
      %v725 = vmul.f32 %v709, %v717
      %v726 = vmul.f32 %v710, %v718
      %v727 = vmul.f32 %v711, %v719
      %v728 = vmul.f32 %v712, %v720
      %v729 = vmul.f32 %v713, %v721
      %v730 = vpack.c.bf16 %v722, %v722
      %v731 = vpack.c.bf16 %v723, %v723
      %v732 = vpack.c.bf16 %v724, %v724
      %v733 = vpack.c.bf16 %v725, %v725
      %v734 = vpack.c.bf16 %v726, %v726
      %v735 = vpack.c.bf16 %v727, %v727
      %v736 = vpack.c.bf16 %v728, %v728
      %v737 = vpack.c.bf16 %v729, %v729
      %v738 = vld [vmem:[%s4] sm:$0xf]
      %v739 = vld [vmem:[%s4 + $0x4] sm:$0xf]
      %v740 = vld [vmem:[%s4 + $0x8] sm:$0xf]
      %v741 = vld [vmem:[%s4 + $0xc] sm:$0xf]
      %v750 = vunpack.c.l.b16 %v730
      %v751 = vunpack.c.l.b16 %v731
      %v752 = vunpack.c.l.b16 %v732
      %v753 = vunpack.c.l.b16 %v733
      %v754 = vunpack.c.l.b16 %v734
      %v755 = vunpack.c.l.b16 %v735
      %v756 = vunpack.c.l.b16 %v736
      %v757 = vunpack.c.l.b16 %v737
      %v758 = vrot.slane %v751, 7
      %vm759 = vcmask 1041409
      %v760 = vsel %vm759, %v758, %v750
      %v761 = vrot.slane %v752, 6
      %vm762 = vcmask 1042434
      %v763 = vsel %vm762, %v761, %v760
      %v764 = vrot.slane %v753, 5
      %vm765 = vcmask 1043459
      %v766 = vsel %vm765, %v764, %v763
      %v767 = vrot.slane %v754, 4
      %vm768 = vcmask 1044484
      %v769 = vsel %vm768, %v767, %v766
      %v770 = vrot.slane %v755, 3
      %vm771 = vcmask 1045509
      %v772 = vsel %vm771, %v770, %v769
      %v773 = vrot.slane %v756, 2
      %vm774 = vcmask 1046534
      %v775 = vsel %vm774, %v773, %v772
      %v776 = vrot.slane %v757, 1
      %vm777 = vcmask 1047559
      %v778 = vsel %vm777, %v776, %v775
      %v779 = vpack.c.b16 %v778, %v778
      %v784 = vunpack.c.l.b16 %v738
      %v785 = vunpack.c.l.b16 %v739
      %v786 = vunpack.c.l.b16 %v740
      %v787 = vunpack.c.l.b16 %v741
      %v788 = vpack.c.b16 %v785, %v784
      %v789 = vpack.c.b16 %v787, %v786
      %v793 = vsel %vm426, %v779, 0
      %795 = vmatprep.subr.bf16.mxu0 0
      %796 = vmatpush1.bf16.msra.mxu0 %v788
      %797 = vmatprep.subr.bf16.mxu0 0
      %798 = vmatpush1.bf16.msra.mxu0 %v789
      %799 = vmatprep.subr.bf16.mxu0 0
      %800 = vmatpush1.bf16.msra.mxu0 0
      %801 = vmatprep.subr.bf16.mxu0 0
      %802 = vmatpush1.bf16.msra.mxu0 0
      %803 = vmatprep.subr.bf16.mxu0 0
      %804 = vmatpush1.bf16.msra.mxu0 0
      %805 = vmatprep.subr.bf16.mxu0 0
      %806 = vmatpush1.bf16.msra.mxu0 0
      %807 = vmatprep.subr.bf16.mxu0 0
      %808 = vmatpush1.bf16.msra.mxu0 0
      %809 = vmatprep.subr.bf16.mxu0 0
      %810 = vmatpush1.bf16.msra.mxu0 0
      %811 = vmatprep.subr.bf16.mxu0 0
      %812 = vmatpush1.bf16.msra.mxu0 0
      %813 = vmatprep.subr.bf16.mxu0 0
      %814 = vmatpush1.bf16.msra.mxu0 0
      %815 = vmatprep.subr.bf16.mxu0 0
      %816 = vmatpush1.bf16.msra.mxu0 0
      %817 = vmatprep.subr.bf16.mxu0 0
      %818 = vmatpush1.bf16.msra.mxu0 0
      %819 = vmatprep.subr.bf16.mxu0 0
      %820 = vmatpush1.bf16.msra.mxu0 0
      %821 = vmatprep.subr.bf16.mxu0 0
      %822 = vmatpush1.bf16.msra.mxu0 0
      %823 = vmatprep.subr.bf16.mxu0 0
      %824 = vmatpush1.bf16.msra.mxu0 0
      %825 = vmatprep.subr.bf16.mxu0 0
      %826 = vmatpush1.bf16.msra.mxu0 0
      %827 = vmatprep.mubr.bf16.mxu0 0
      %828 = vmatmul.mubr.bf16.gmra.mrb[0].mxu0 %v793
      %v829 = vpop.f32.mrb[0].mxu0
      %v830 = vadd.f32 0.0, %v829
      %v831 = vpop.f32.mrb[0].mxu0
      %v832 = vpop.f32.mrb[0].mxu0
      %v833 = vpop.f32.mrb[0].mxu0
      %834 = vdwg.mxu0
      %s835 = scalar_lea.vmem %s4, 16
      %v836 = vld [vmem:[%s835] sm:$0xf]
      %v837 = vld [vmem:[%s835 + $0x4] sm:$0xf]
      %v838 = vld [vmem:[%s835 + $0x8] sm:$0xf]
      %v839 = vld [vmem:[%s835 + $0xc] sm:$0xf]
      %s840 = scalar_lea.vmem %s4, 32
      %v841 = vld [vmem:[%s840] sm:$0xf]
      %v842 = vld [vmem:[%s840 + $0x4] sm:$0xf]
      %v843 = vld [vmem:[%s840 + $0x8] sm:$0xf]
      %v844 = vld [vmem:[%s840 + $0xc] sm:$0xf]
      %v849 = vunpack.c.l.b16 %v841
      %v850 = vunpack.c.l.b16 %v842
      %v851 = vunpack.c.l.b16 %v843
      %v852 = vunpack.c.l.b16 %v844
      %v853 = vpack.c.b16 %v850, %v849
      %v854 = vpack.c.b16 %v852, %v851
      %857 = vmatprep.subr.bf16.mxu0 0
      %858 = vmatpush1.bf16.msra.mxu0 %v853
      %859 = vmatprep.subr.bf16.mxu0 0
      %860 = vmatpush1.bf16.msra.mxu0 %v854
      %861 = vmatprep.subr.bf16.mxu0 0
      %862 = vmatpush1.bf16.msra.mxu0 0
      %863 = vmatprep.subr.bf16.mxu0 0
      %864 = vmatpush1.bf16.msra.mxu0 0
      %865 = vmatprep.subr.bf16.mxu0 0
      %866 = vmatpush1.bf16.msra.mxu0 0
      %867 = vmatprep.subr.bf16.mxu0 0
      %868 = vmatpush1.bf16.msra.mxu0 0
      %869 = vmatprep.subr.bf16.mxu0 0
      %870 = vmatpush1.bf16.msra.mxu0 0
      %871 = vmatprep.subr.bf16.mxu0 0
      %872 = vmatpush1.bf16.msra.mxu0 0
      %873 = vmatprep.subr.bf16.mxu0 0
      %874 = vmatpush1.bf16.msra.mxu0 0
      %875 = vmatprep.subr.bf16.mxu0 0
      %876 = vmatpush1.bf16.msra.mxu0 0
      %877 = vmatprep.subr.bf16.mxu0 0
      %878 = vmatpush1.bf16.msra.mxu0 0
      %879 = vmatprep.subr.bf16.mxu0 0
      %880 = vmatpush1.bf16.msra.mxu0 0
      %881 = vmatprep.subr.bf16.mxu0 0
      %882 = vmatpush1.bf16.msra.mxu0 0
      %883 = vmatprep.subr.bf16.mxu0 0
      %884 = vmatpush1.bf16.msra.mxu0 0
      %885 = vmatprep.subr.bf16.mxu0 0
      %886 = vmatpush1.bf16.msra.mxu0 0
      %887 = vmatprep.subr.bf16.mxu0 0
      %888 = vmatpush1.bf16.msra.mxu0 0
      %889 = vmatprep.mubr.bf16.mxu0 0
      %890 = vmatmul.mubr.bf16.gmra.mrb[0].mxu0 %v793
      %v891 = vpop.f32.mrb[0].mxu0
      %v892 = vadd.f32 0.0, %v891
      %v893 = vpop.f32.mrb[0].mxu0
      %v894 = vpop.f32.mrb[0].mxu0
      %v895 = vpop.f32.mrb[0].mxu0
      %896 = vdwg.mxu0
      %vm897 = vcmp.lt.s32.totalorder %v326, 0
      %v898 = vsub.s32 0, %v326
      %v899 = vsel %vm897, %v898, %v326
      %v900 = vshrl.u32 %v899, 3
      %v901 = vand.u32 %v899, 7
      %v902 = vsub.s32 0, %v901
      %v903 = vsel %vm897, %v902, %v901
      %vm904 = vcmp.ne.s32.totalorder %v903, 0
      %vm905 = vcmp.lt.s32.totalorder %v903, 0
      %vm906 = vmand %vm905, %vm904
      %v907 = vadd.s32 %v903, 8
      %v908 = vsel %vm906, %v907, %v903
      %vm909 = vcmp.eq.s32.totalorder %v908, 0
      %vm910 = vcmp.eq.s32.totalorder %v908, 7
      %v911 = vrot.slane %v830, 7
      %v912 = vrot.slane %v892, 1
      %v913 = vsel %vm909, 1, 0
      %vm914 = vcmp.eq.s32.totalorder %v913, 1
      %v915 = vsel %vm914, 0.0, %v911
      %v920 = vunpack.c.l.b16 %v836
      %v921 = vunpack.c.l.b16 %v837
      %v922 = vunpack.c.l.b16 %v838
      %v923 = vunpack.c.l.b16 %v839
      %v924 = vpack.c.b16 %v921, %v920
      %v925 = vpack.c.b16 %v923, %v922
      %928 = vmatprep.subr.bf16.mxu0 0
      %929 = vmatpush1.bf16.msra.mxu0 %v924
      %930 = vmatprep.subr.bf16.mxu0 0
      %931 = vmatpush1.bf16.msra.mxu0 %v925
      %932 = vmatprep.subr.bf16.mxu0 0
      %933 = vmatpush1.bf16.msra.mxu0 0
      %934 = vmatprep.subr.bf16.mxu0 0
      %935 = vmatpush1.bf16.msra.mxu0 0
      %936 = vmatprep.subr.bf16.mxu0 0
      %937 = vmatpush1.bf16.msra.mxu0 0
      %938 = vmatprep.subr.bf16.mxu0 0
      %939 = vmatpush1.bf16.msra.mxu0 0
      %940 = vmatprep.subr.bf16.mxu0 0
      %941 = vmatpush1.bf16.msra.mxu0 0
      %942 = vmatprep.subr.bf16.mxu0 0
      %943 = vmatpush1.bf16.msra.mxu0 0
      %944 = vmatprep.subr.bf16.mxu0 0
      %945 = vmatpush1.bf16.msra.mxu0 0
      %946 = vmatprep.subr.bf16.mxu0 0
      %947 = vmatpush1.bf16.msra.mxu0 0
      %948 = vmatprep.subr.bf16.mxu0 0
      %949 = vmatpush1.bf16.msra.mxu0 0
      %950 = vmatprep.subr.bf16.mxu0 0
      %951 = vmatpush1.bf16.msra.mxu0 0
      %952 = vmatprep.subr.bf16.mxu0 0
      %953 = vmatpush1.bf16.msra.mxu0 0
      %954 = vmatprep.subr.bf16.mxu0 0
      %955 = vmatpush1.bf16.msra.mxu0 0
      %956 = vmatprep.subr.bf16.mxu0 0
      %957 = vmatpush1.bf16.msra.mxu0 0
      %958 = vmatprep.subr.bf16.mxu0 0
      %959 = vmatpush1.bf16.msra.mxu0 0
      %960 = vmatprep.mubr.bf16.mxu0 0
      %961 = vmatmul.mubr.bf16.gmra.mrb[0].mxu0 %v793
      %v962 = vpop.f32.mrb[0].mxu0
      %v963 = vadd.f32 %v915, %v962
      %v964 = vpop.f32.mrb[0].mxu0
      %v965 = vpop.f32.mrb[0].mxu0
      %v966 = vpop.f32.mrb[0].mxu0
      %967 = vdwg.mxu0
      %v968 = vsel %vm910, 1, 0
      %vm969 = vcmp.eq.s32.totalorder %v968, 1
      %v970 = vsel %vm969, 0.0, %v912
      %v971 = vadd.f32 %v963, %v970
      %v972 = vrot.slane %v971, 1
      %v973 = vmax.f32 %v971, %v972
      %v975 = vcombine.high %v973, %v973
      %v977 = vunpack.c.l.s4 1983009808
      %v978 = vunpack.c.0.s8 %v977
      %v979 = vlaneseq
      %v980 = vshrl.u32 %v979, 7
      %v981 = vsub.s32 %v978, %v980
      %v982 = vrot.slane %v973, %v981
      %v984 = vunpack.c.l.s4 1983009808
      %v985 = vunpack.c.0.s8 %v984
      %v986 = vlaneseq
      %v987 = vshrl.u32 %v986, 7
      %v988 = vsub.s32 %v985, %v987
      %v989 = vrot.slane %v975, %v988
      %v990 = vcombine.high %v982, %v982
      %v991 = vcombine.high %v989, %v989
      %v996 = vmul.f32 %v982, 0.70710677
      %v997 = vmul.f32 %v990, 0.70710677
      %v998 = vmul.f32 %v989, 0.70710677
      %v999 = vmul.f32 %v991, 0.70710677
      %v1000 = vand.u32 2147483647, %v996
      %v1001 = vand.u32 2147483647, %v997
      %v1002 = vand.u32 2147483647, %v998
      %v1003 = vand.u32 2147483647, %v999
      %v1004 = vmul.f32 %v1000, 0.3275911
      %v1005 = vmul.f32 %v1001, 0.3275911
      %v1006 = vmul.f32 %v1002, 0.3275911
      %v1007 = vmul.f32 %v1003, 0.3275911
      %v1008 = vadd.f32 %v1004, 1.0
      %v1009 = vadd.f32 %v1005, 1.0
      %v1010 = vadd.f32 %v1006, 1.0
      %v1011 = vadd.f32 %v1007, 1.0
      %v1012 = vrcp.pop %v1008
      %v1013 = vrcp.pop %v1009
      %v1014 = vrcp.pop %v1010
      %v1015 = vrcp.pop %v1011
      %v1016 = vmul.f32 %v1012, 1.0614054
      %v1017 = vmul.f32 %v1013, 1.0614054
      %v1018 = vmul.f32 %v1014, 1.0614054
      %v1019 = vmul.f32 %v1015, 1.0614054
      %v1020 = vadd.f32 %v1016, -1.4531521
      %v1021 = vadd.f32 %v1017, -1.4531521
      %v1022 = vadd.f32 %v1018, -1.4531521
      %v1023 = vadd.f32 %v1019, -1.4531521
      %v1024 = vmul.f32 %v1020, %v1012
      %v1025 = vmul.f32 %v1021, %v1013
      %v1026 = vmul.f32 %v1022, %v1014
      %v1027 = vmul.f32 %v1023, %v1015
      %v1028 = vadd.f32 %v1024, 1.4214138
      %v1029 = vadd.f32 %v1025, 1.4214138
      %v1030 = vadd.f32 %v1026, 1.4214138
      %v1031 = vadd.f32 %v1027, 1.4214138
      %v1032 = vmul.f32 %v1028, %v1012
      %v1033 = vmul.f32 %v1029, %v1013
      %v1034 = vmul.f32 %v1030, %v1014
      %v1035 = vmul.f32 %v1031, %v1015
      %v1036 = vadd.f32 %v1032, -0.28449672
      %v1037 = vadd.f32 %v1033, -0.28449672
      %v1038 = vadd.f32 %v1034, -0.28449672
      %v1039 = vadd.f32 %v1035, -0.28449672
      %v1040 = vmul.f32 %v1036, %v1012
      %v1041 = vmul.f32 %v1037, %v1013
      %v1042 = vmul.f32 %v1038, %v1014
      %v1043 = vmul.f32 %v1039, %v1015
      %v1044 = vadd.f32 %v1040, 0.2548296
      %v1045 = vadd.f32 %v1041, 0.2548296
      %v1046 = vadd.f32 %v1042, 0.2548296
      %v1047 = vadd.f32 %v1043, 0.2548296
      %v1048 = vmul.f32 %v1044, %v1012
      %v1049 = vmul.f32 %v1045, %v1013
      %v1050 = vmul.f32 %v1046, %v1014
      %v1051 = vmul.f32 %v1047, %v1015
      %v1052 = vsub.f32 0.0, %v1000
      %v1053 = vsub.f32 0.0, %v1001
      %v1054 = vsub.f32 0.0, %v1002
      %v1055 = vsub.f32 0.0, %v1003
      %v1056 = vmul.f32 %v1052, %v1000
      %v1057 = vmul.f32 %v1053, %v1001
      %v1058 = vmul.f32 %v1054, %v1002
      %v1059 = vmul.f32 %v1055, %v1003
      %v1060 = vmul.f32 %v1056, 1.442695
      %v1061 = vpow.pop %v1060
      %v1062 = vmul.f32 %v1057, 1.442695
      %v1063 = vpow.pop %v1062
      %v1064 = vmul.f32 %v1058, 1.442695
      %v1065 = vpow.pop %v1064
      %v1066 = vmul.f32 %v1059, 1.442695
      %v1067 = vpow.pop %v1066
      %v1068 = vmul.f32 %v1048, %v1061
      %v1069 = vmul.f32 %v1049, %v1063
      %v1070 = vmul.f32 %v1050, %v1065
      %v1071 = vmul.f32 %v1051, %v1067
      %v1072 = vsub.f32 1.0, %v1068
      %v1073 = vsub.f32 1.0, %v1069
      %v1074 = vsub.f32 1.0, %v1070
      %v1075 = vsub.f32 1.0, %v1071
      %vm1076 = vcmp.ge.f32.partialorder %v996, 0.0
      %vm1077 = vcmp.ge.f32.partialorder %v997, 0.0
      %vm1078 = vcmp.ge.f32.partialorder %v998, 0.0
      %vm1079 = vcmp.ge.f32.partialorder %v999, 0.0
      %v1080 = vsub.f32 0.0, %v1072
      %v1081 = vsub.f32 0.0, %v1073
      %v1082 = vsub.f32 0.0, %v1074
      %v1083 = vsub.f32 0.0, %v1075
      %v1084 = vsel %vm1076, %v1072, %v1080
      %v1085 = vsel %vm1077, %v1073, %v1081
      %v1086 = vsel %vm1078, %v1074, %v1082
      %v1087 = vsel %vm1079, %v1075, %v1083
      %v1088 = vmul.f32 %v982, 0.5
      %v1089 = vmul.f32 %v990, 0.5
      %v1090 = vmul.f32 %v989, 0.5
      %v1091 = vmul.f32 %v991, 0.5
      %v1092 = vadd.f32 %v1084, 1.0
      %v1093 = vadd.f32 %v1085, 1.0
      %v1094 = vadd.f32 %v1086, 1.0
      %v1095 = vadd.f32 %v1087, 1.0
      %v1096 = vmul.f32 %v1088, %v1092
      %v1097 = vmul.f32 %v1089, %v1093
      %v1098 = vmul.f32 %v1090, %v1094
      %v1099 = vmul.f32 %v1091, %v1095
      %v1101 = vlaneseq
      %v1102 = vshrl.u32 %v1101, 7
      %v1103 = vsub.s32 0, %v1102
      %v1104 = vrot.slane %v1097, %v1103
      %1105 = vrot.lane.b32.xlu0 %v1104, 32
      %v1106 = vpop.permute.xlu0 %1105
      %v1109 = vlaneseq
      %v1110 = vshrl.u32 %v1109, 7
      %v1111 = vsub.s32 0, %v1110
      %v1112 = vrot.slane %v1098, %v1111
      %1113 = vrot.lane.b32.xlu0 %v1112, 64
      %v1114 = vpop.permute.xlu0 %1113
      %v1117 = vlaneseq
      %v1118 = vshrl.u32 %v1117, 7
      %v1119 = vsub.s32 0, %v1118
      %v1120 = vrot.slane %v1099, %v1119
      %1121 = vrot.lane.b32.xlu0 %v1120, 96
      %v1122 = vpop.permute.xlu0 %1121
      %v1124 = vsel %vm426, %v1096, %v1106
      %vm1125 = vcmask 523264
      %v1126 = vsel %vm1125, %v1124, %v1114
      %vm1127 = vcmask 785408
      %v1128 = vsel %vm1127, %v1126, %v1122
      %1129 = vst [vmem:[%s222] sm:$0x1] %v1128
      %p1130 = scmp.lt.s32.totalorder %s16, 1
      %s1131 = scalar_select %p1130, %s16, 1
      %s1132 = scalar_lea.vmem %s5, %s1131
      // Predicated region
      $region41: #{_lambda_.1} parent=39 // pred_check
        %p1133 = pneg %p144
      $region42: #{_lambda_.1} parent=39 // pred_check_branch
        %1135 = sbr.rel (%p1133) target = $region44
      $region43: #{_lambda_.1} parent=39 // pred_region
        _
      $region44: #{_lambda_.1} parent=39 // pred_fallthru
        _
    $region40: #{_lambda_.1} parent=5 // pred_fallthru
      _
    %p1136 = scmp.le.s32.totalorder 2, %s11
    // Predicated region
    $region45: #{_lambda_.1} parent=5 // pred_check
      %p1137 = pneg %p1136
    $region46: #{_lambda_.1} parent=5 // pred_check_branch
      %1139 = sbr.rel (%p1137) target = $region48
    $region47: #{_lambda_.1} parent=5 // pred_region
      %s1140 = ssub.s32 %s11, 2
      // Predicated region
      $region49: #{_lambda_.1} parent=47 // pred_check
        %p1141 = pneg %p150
      $region50: #{_lambda_.1} parent=47 // pred_check_branch
        %1143 = sbr.rel (%p1141) target = $region52
      $region51: #{_lambda_.1} parent=47 // pred_region
        %p1144 = scmp.lt.s32.totalorder %s17, 1
        %s1145 = scalar_select %p1144, %s17, 1
        %s1146 = scalar_lea.vmem %s5, %s1145
      $region52: #{_lambda_.1} parent=47 // pred_fallthru
        _
    $region48: #{_lambda_.1} parent=5 // pred_fallthru
      _
  $region6: #{_lambda_.1} parent=0 // loop_footer
    %s15 = sadd.s32 1, %s11
  $region7: #{_lambda_.1} parent=0 // loop_footer_branch
    %10 = sbr.rel target = $region3
  $region8: #{_lambda_.1} parent=0 // loop_exit
    _

</llo_original>
